<compile_context>
chip_gen: v7x
topology: tpu7x:2x2x1
jax: 0.10.0
libtpu: 0.0.40
codegen_flags: <defaults>
</compile_context>

<pallas_src>
import functools

import jax
import jax.numpy as jnp
from jax.experimental import pallas as pl
from jax.experimental.pallas import tpu as pltpu


def _gnn_kernel(step, BT, N, H,
                a_in_ref, a_out_ref, h_ref,
                w_h_ref, b_h_ref,
                w_gi_in_ref, w_gi_out_ref, b_gi_ref,
                b_iah_ref, b_oah_ref,
                out_ref):
    f32 = jnp.float32
    rows = BT * N
    mm_dtype = w_h_ref.dtype            # matmul operand dtype (bf16 or f32)

    # Hoist all loads out of the recurrence.
    A_in = a_in_ref[...].astype(f32)    # (BT, N, N)   VPU path stays f32
    A_out = a_out_ref[...].astype(f32)  # (BT, N, N)
    W_h = w_h_ref[...]                  # (H, 5H)  [W_in.T | W_out.T | W_hh.T]
    b_h = b_h_ref[...].astype(f32)      # (1, 5H)  [b_in | b_out | b_hh]
    W_gi_in = w_gi_in_ref[...]          # (H, 3H)  w_ih[:, :H].T
    W_gi_out = w_gi_out_ref[...]        # (H, 3H)  w_ih[:, H:].T
    b_gi = b_gi_ref[...].astype(f32)    # (1, 3H)
    b_iah = b_iah_ref[...].astype(f32)  # (1, H)
    b_oah = b_oah_ref[...].astype(f32)  # (1, H)

    # Carry hidden in f32 as one flat (rows, H) matrix.
    hidden = h_ref[...].astype(f32)     # (rows, H)

    def cell(h_flat):
        h_mm = h_flat.astype(mm_dtype)

        # One wide, lane-dense MXU matmul for everything that reads hidden:
        # columns [0:H)=edge_in, [H:2H)=edge_out, [2H:5H)=gh (r, i, n).
        hcat = jnp.dot(h_mm, W_h, preferred_element_type=f32) + b_h  # (rows,5H)

        edge_in = hcat[:, 0 * H:1 * H].reshape(BT, N, H)
        edge_out = hcat[:, 1 * H:2 * H].reshape(BT, N, H)

        # Adjacency contraction: unrolled VPU broadcast-FMA over the N=8
        # neighbours (replaces 2*BT tiny 8x8x32 MXU matmuls per cell).
        inp_in = jnp.zeros((BT, N, H), f32)
        inp_out = jnp.zeros((BT, N, H), f32)
        for j in range(N):
            inp_in = inp_in + A_in[:, :, j:j + 1] * edge_in[:, j:j + 1, :]
            inp_out = inp_out + A_out[:, :, j:j + 1] * edge_out[:, j:j + 1, :]
        inp_in = inp_in.reshape(rows, H) + b_iah     # (rows, H)
        inp_out = inp_out.reshape(rows, H) + b_oah   # (rows, H)

        # Fused gate matmuls (no lane concatenate, no per-gate loop).
        gi = (jnp.dot(inp_in.astype(mm_dtype), W_gi_in,
                      preferred_element_type=f32)
              + jnp.dot(inp_out.astype(mm_dtype), W_gi_out,
                        preferred_element_type=f32)
              + b_gi)                                # (rows, 3H)

        h_r = hcat[:, 2 * H:3 * H]
        h_i = hcat[:, 3 * H:4 * H]
        h_n = hcat[:, 4 * H:5 * H]
        resetgate = jax.nn.sigmoid(gi[:, 0 * H:1 * H] + h_r)
        inputgate = jax.nn.sigmoid(gi[:, 1 * H:2 * H] + h_i)
        newgate = jnp.tanh(gi[:, 2 * H:3 * H] + resetgate * h_n)
        return newgate + inputgate * (h_flat - newgate)

    if step <= 8:
        for _ in range(step):               # static unroll: LLO sees schedule
            hidden = cell(hidden)
    else:
        hidden = jax.lax.fori_loop(0, step, lambda _, h: cell(h), hidden,
                                   unroll=True)

    out_ref[...] = hidden.astype(out_ref.dtype)


def _choose_b_tile(B, N, max_rows=4096):
    """Pick a batch tile: no padding if possible, >=2 grid steps (v7x), and
    rows = BT*N small enough to keep VMEM trivial."""
    max_bt = max(1, max_rows // max(N, 1))
    cap = min(B, max_bt)
    for bt in range(cap, max(cap // 2, 1) - 1, -1):
        if B % bt == 0 and B // bt >= 2:
            return bt
    return cap


def gnn_forward(A, hidden, params, step=1, b_tile=None,
                compute_dtype=jnp.bfloat16):
    """Pallas implementation of GNN.forward(A, hidden).

    compute_dtype: matmul operand dtype (accumulation & gate math are always
    f32).  Default bf16 (v6e/v7x MXU-native); pass jnp.float32 for
    PyTorch-faithful numerics.
    """
    B, N, twoN = A.shape
    _, _, H = hidden.shape
    assert twoN == 2 * N
    out_dtype = hidden.dtype
    f32 = jnp.float32
    mm_dtype = jnp.dtype(compute_dtype) if compute_dtype is not None else f32

    # --- Host-side one-time prep (cheap XLA ops) --------------------------
    A_in = A[:, :, :N].astype(f32)            # adjacency feeds the VPU path
    A_out = A[:, :, N:].astype(f32)
    hidden_flat = hidden.reshape(B * N, H)    # flat (rows, H) slab

    w_in = params["w_in"]
    w_out = params["w_out"]
    w_ih = params["w_ih"]                     # (3H, 2H)
    w_hh = params["w_hh"]                     # (3H, H)
    W_h = jnp.concatenate([w_in.T, w_out.T, w_hh.T], axis=1).astype(mm_dtype)
    b_h = jnp.concatenate(
        [params["b_in"], params["b_out"], params["b_hh"]]
    ).reshape(1, 5 * H).astype(f32)
    W_gi_in = w_ih[:, :H].T.astype(mm_dtype)   # (H, 3H)
    W_gi_out = w_ih[:, H:].T.astype(mm_dtype)  # (H, 3H)
    b_gi = params["b_ih"].reshape(1, 3 * H).astype(f32)
    b_iah = params["b_iah"].reshape(1, H).astype(f32)
    b_oah = params["b_oah"].reshape(1, H).astype(f32)

    # Batch tiling (pad only if B has no usable divisor; padding discarded).
    BT = int(b_tile) if b_tile is not None else _choose_b_tile(B, N)
    BT = max(1, min(BT, B))
    B_pad = -(-B // BT) * BT
    if B_pad != B:
        padA = ((0, B_pad - B), (0, 0), (0, 0))
        A_in = jnp.pad(A_in, padA)
        A_out = jnp.pad(A_out, padA)
        hidden_flat = jnp.pad(hidden_flat, ((0, (B_pad - B) * N), (0, 0)))

    rows_t = BT * N
    full2 = lambda shp: pl.BlockSpec(shp, lambda b: (0, 0))

    grid_spec = pltpu.PrefetchScalarGridSpec(
        num_scalar_prefetch=0,
        grid=(B_pad // BT,),
        in_specs=[
            pl.BlockSpec((BT, N, N), lambda b: (b, 0, 0)),   # A_in
            pl.BlockSpec((BT, N, N), lambda b: (b, 0, 0)),   # A_out
            pl.BlockSpec((rows_t, H), lambda b: (b, 0)),     # hidden (flat)
            full2((H, 5 * H)), full2((1, 5 * H)),            # W_h, b_h
            full2((H, 3 * H)), full2((H, 3 * H)),            # W_gi_in/out
            full2((1, 3 * H)),                               # b_gi
            full2((1, H)), full2((1, H)),                    # b_iah, b_oah
        ],
        out_specs=pl.BlockSpec((rows_t, H), lambda b: (b, 0)),
    )

    kernel = functools.partial(_gnn_kernel, int(step), BT, N, H)

    out_flat = pl.pallas_call(
        kernel,
        out_shape=jax.ShapeDtypeStruct((B_pad * N, H), out_dtype),
        grid_spec=grid_spec,
        compiler_params=pltpu.CompilerParams(
            dimension_semantics=("parallel",)),
    )(A_in, A_out, hidden_flat,
      W_h, b_h, W_gi_in, W_gi_out, b_gi, b_iah, b_oah)

    out = out_flat.reshape(B_pad, N, H)
    return out[:B] if B_pad != B else out


def init_params(key, hidden_size):
    """Deterministic parameter init (uniform ~ PyTorch GRU-style stdv)."""
    H = hidden_size
    stdv = 1.0 / (H ** 0.5)
    keys = jax.random.split(key, 10)
    u = lambda k, shape: jax.random.uniform(
        k, shape, jnp.float32, minval=-stdv, maxval=stdv)
    return {
        "w_ih": u(keys[0], (3 * H, 2 * H)),
        "w_hh": u(keys[1], (3 * H, H)),
        "b_ih": u(keys[2], (3 * H,)),
        "b_hh": u(keys[3], (3 * H,)),
        "b_iah": u(keys[4], (H,)),
        "b_oah": u(keys[5], (H,)),
        "w_in": u(keys[6], (H, H)),
        "b_in": u(keys[7], (H,)),
        "w_out": u(keys[8], (H, H)),
        "b_out": u(keys[9], (H,)),
        # NOTE: linear_edge_f exists in the module's __init__ but is unused
        # in forward; intentionally omitted.
    }


def _reference(A, hidden, p, step=1):
    """Pure-JAX reference mirroring the PyTorch GNNCell, for checking."""
    N = A.shape[1]
    H = hidden.shape[2]
    for _ in range(step):
        edge_in = hidden @ p["w_in"].T + p["b_in"]
        edge_out = hidden @ p["w_out"].T + p["b_out"]
        input_in = jnp.einsum("bij,bjh->bih", A[:, :, :N], edge_in) + p["b_iah"]
        input_out = jnp.einsum("bij,bjh->bih", A[:, :, N:2 * N], edge_out) + p["b_oah"]
        inputs = jnp.concatenate([input_in, input_out], axis=2)
        gi = inputs @ p["w_ih"].T + p["b_ih"]
        gh = hidden @ p["w_hh"].T + p["b_hh"]
        i_r, i_i, i_n = gi[..., :H], gi[..., H:2 * H], gi[..., 2 * H:]
        h_r, h_i, h_n = gh[..., :H], gh[..., H:2 * H], gh[..., 2 * H:]
        resetgate = jax.nn.sigmoid(i_r + h_r)
        inputgate = jax.nn.sigmoid(i_i + h_i)
        newgate = jnp.tanh(i_n + resetgate * h_n)
        hidden = newgate + inputgate * (hidden - newgate)
    return hidden


if __name__ == "__main__":
    B, N, H = 20, 8, 32     # batch, nodes, hidden (auto tile -> BT=10, grid=2)

    key = jax.random.PRNGKey(0)
    k_a, k_h, k_p = jax.random.split(key, 3)

    A = jax.random.uniform(k_a, (B, N, 2 * N), jnp.float32)
    hidden = jax.random.normal(k_h, (B, N, H), jnp.float32)
    params = init_params(k_p, H)

    # Strict f32 check, step=1.
    out = jax.block_until_ready(
        gnn_forward(A, hidden, params, step=1, compute_dtype=jnp.float32))
    ref = _reference(A, hidden, params, step=1)
    assert out.shape == (B, N, H)
    assert jnp.allclose(out, ref, atol=1e-4, rtol=1e-4), "mismatch (step=1)"

    # Strict f32 check, step=3 (unrolled recurrence path).
    out3 = jax.block_until_ready(
        gnn_forward(A, hidden, params, step=3, compute_dtype=jnp.float32))
    ref3 = _reference(A, hidden, params, step=3)
    assert jnp.allclose(out3, ref3, atol=1e-4, rtol=1e-4), "mismatch (step=3)"

    # Default bf16-operand path (v6e/v7x MXU friendly); loose sanity check.
    out_bf = jax.block_until_ready(gnn_forward(A, hidden, params, step=1))
    err = float(jnp.mean(jnp.abs(out_bf.astype(jnp.float32) - ref)))
    assert jnp.isfinite(jnp.asarray(err)) and err < 5e-2, "bf16 path diverged"

    print("KERNEL_OK")
</pallas_src>

<mosaic_0001>
module attributes {stable_mosaic.version = 11 : i64} {
  func.func @_gnn_kernel(%arg0: i32, %arg1: memref<10x8x8xf32, #tpu.memory_space<vmem>>, %arg2: memref<10x8x8xf32, #tpu.memory_space<vmem>>, %arg3: memref<80x32xf32, #tpu.memory_space<vmem>>, %arg4: memref<32x160xf32, #tpu.memory_space<vmem>>, %arg5: memref<1x160xf32, #tpu.memory_space<vmem>>, %arg6: memref<32x96xf32, #tpu.memory_space<vmem>>, %arg7: memref<32x96xf32, #tpu.memory_space<vmem>>, %arg8: memref<1x96xf32, #tpu.memory_space<vmem>>, %arg9: memref<1x32xf32, #tpu.memory_space<vmem>>, %arg10: memref<1x32xf32, #tpu.memory_space<vmem>>, %arg11: memref<80x32xf32, #tpu.memory_space<vmem>>) attributes {dimension_semantics = [#tpu.dimension_semantics<parallel>], iteration_bounds = array<i64: 2>, scalar_prefetch = 0 : i64, scratch_operands = 0 : i64, tpu.core_type = #tpu.core_type<tc>, window_params = [{transform_indices = @transform_0, window_bounds = array<i64: 10, 8, 8>}, {transform_indices = @transform_1, window_bounds = array<i64: 10, 8, 8>}, {transform_indices = @transform_2, window_bounds = array<i64: 80, 32>}, {pipeline_mode = #tpu.pipeline_mode<synchronous>, transform_indices = @transform_3, window_bounds = array<i64: 32, 160>}, {pipeline_mode = #tpu.pipeline_mode<synchronous>, transform_indices = @transform_4, window_bounds = array<i64: 1, 160>}, {pipeline_mode = #tpu.pipeline_mode<synchronous>, transform_indices = @transform_5, window_bounds = array<i64: 32, 96>}, {pipeline_mode = #tpu.pipeline_mode<synchronous>, transform_indices = @transform_6, window_bounds = array<i64: 32, 96>}, {pipeline_mode = #tpu.pipeline_mode<synchronous>, transform_indices = @transform_7, window_bounds = array<i64: 1, 96>}, {pipeline_mode = #tpu.pipeline_mode<synchronous>, transform_indices = @transform_8, window_bounds = array<i64: 1, 32>}, {pipeline_mode = #tpu.pipeline_mode<synchronous>, transform_indices = @transform_9, window_bounds = array<i64: 1, 32>}, {transform_indices = @transform_10, window_bounds = array<i64: 80, 32>}]} {
    %c0 = arith.constant 0 : index
    %c0_0 = arith.constant 0 : index
    %c0_1 = arith.constant 0 : index
    %0 = vector.load %arg1[%c0, %c0_0, %c0_1] : memref<10x8x8xf32, #tpu.memory_space<vmem>>, vector<10x8x8xf32>
    %c0_2 = arith.constant 0 : index
    %c0_3 = arith.constant 0 : index
    %c0_4 = arith.constant 0 : index
    %1 = vector.load %arg2[%c0_2, %c0_3, %c0_4] : memref<10x8x8xf32, #tpu.memory_space<vmem>>, vector<10x8x8xf32>
    %c0_5 = arith.constant 0 : index
    %c0_6 = arith.constant 0 : index
    %2 = vector.load %arg4[%c0_5, %c0_6] : memref<32x160xf32, #tpu.memory_space<vmem>>, vector<32x160xf32>
    %c0_7 = arith.constant 0 : index
    %c0_8 = arith.constant 0 : index
    %3 = vector.load %arg5[%c0_7, %c0_8] : memref<1x160xf32, #tpu.memory_space<vmem>>, vector<1x160xf32>
    %c0_9 = arith.constant 0 : index
    %c0_10 = arith.constant 0 : index
    %4 = vector.load %arg6[%c0_9, %c0_10] : memref<32x96xf32, #tpu.memory_space<vmem>>, vector<32x96xf32>
    %c0_11 = arith.constant 0 : index
    %c0_12 = arith.constant 0 : index
    %5 = vector.load %arg7[%c0_11, %c0_12] : memref<32x96xf32, #tpu.memory_space<vmem>>, vector<32x96xf32>
    %c0_13 = arith.constant 0 : index
    %c0_14 = arith.constant 0 : index
    %6 = vector.load %arg8[%c0_13, %c0_14] : memref<1x96xf32, #tpu.memory_space<vmem>>, vector<1x96xf32>
    %c0_15 = arith.constant 0 : index
    %c0_16 = arith.constant 0 : index
    %7 = vector.load %arg9[%c0_15, %c0_16] : memref<1x32xf32, #tpu.memory_space<vmem>>, vector<1x32xf32>
    %c0_17 = arith.constant 0 : index
    %c0_18 = arith.constant 0 : index
    %8 = vector.load %arg10[%c0_17, %c0_18] : memref<1x32xf32, #tpu.memory_space<vmem>>, vector<1x32xf32>
    %c0_19 = arith.constant 0 : index
    %c0_20 = arith.constant 0 : index
    %9 = vector.load %arg3[%c0_19, %c0_20] : memref<80x32xf32, #tpu.memory_space<vmem>>, vector<80x32xf32>
    %cst = arith.constant dense<0.000000e+00> : vector<80x160xf32>
    %10 = tpu.matmul %9, %2, %cst {dimension_numbers = #tpu.dot_dimension_numbers<[1], [0], [0], [1], [0, 0, 1, 1], [], []>} : vector<80x32xf32>, vector<32x160xf32>, vector<80x160xf32> -> vector<80x160xf32>
    %11 = vector.broadcast %3 : vector<1x160xf32> to vector<80x160xf32>
    %12 = arith.addf %10, %11 : vector<80x160xf32>
    %13 = vector.extract_strided_slice %12 {offsets = [0, 0], sizes = [80, 32], strides = [1, 1]} : vector<80x160xf32> to vector<80x32xf32>
    %14 = vector.shape_cast %13 : vector<80x32xf32> to vector<10x8x32xf32>
    %15 = vector.extract_strided_slice %12 {offsets = [0, 32], sizes = [80, 32], strides = [1, 1]} : vector<80x160xf32> to vector<80x32xf32>
    %16 = vector.shape_cast %15 : vector<80x32xf32> to vector<10x8x32xf32>
    %cst_21 = arith.constant 0.000000e+00 : f32
    %17 = vector.broadcast %cst_21 : f32 to vector<10x8x32xf32>
    %cst_22 = arith.constant 0.000000e+00 : f32
    %18 = vector.broadcast %cst_22 : f32 to vector<10x8x32xf32>
    %19 = vector.extract_strided_slice %0 {offsets = [0, 0, 0], sizes = [10, 8, 1], strides = [1, 1, 1]} : vector<10x8x8xf32> to vector<10x8x1xf32>
    %20 = vector.extract_strided_slice %14 {offsets = [0, 0, 0], sizes = [10, 1, 32], strides = [1, 1, 1]} : vector<10x8x32xf32> to vector<10x1x32xf32>
    %21 = vector.broadcast %19 : vector<10x8x1xf32> to vector<10x8x32xf32>
    %22 = vector.broadcast %20 : vector<10x1x32xf32> to vector<10x8x32xf32>
    %23 = arith.mulf %21, %22 : vector<10x8x32xf32>
    %24 = arith.addf %17, %23 : vector<10x8x32xf32>
    %25 = vector.extract_strided_slice %1 {offsets = [0, 0, 0], sizes = [10, 8, 1], strides = [1, 1, 1]} : vector<10x8x8xf32> to vector<10x8x1xf32>
    %26 = vector.extract_strided_slice %16 {offsets = [0, 0, 0], sizes = [10, 1, 32], strides = [1, 1, 1]} : vector<10x8x32xf32> to vector<10x1x32xf32>
    %27 = vector.broadcast %25 : vector<10x8x1xf32> to vector<10x8x32xf32>
    %28 = vector.broadcast %26 : vector<10x1x32xf32> to vector<10x8x32xf32>
    %29 = arith.mulf %27, %28 : vector<10x8x32xf32>
    %30 = arith.addf %18, %29 : vector<10x8x32xf32>
    %31 = vector.extract_strided_slice %0 {offsets = [0, 0, 1], sizes = [10, 8, 1], strides = [1, 1, 1]} : vector<10x8x8xf32> to vector<10x8x1xf32>
    %32 = vector.extract_strided_slice %14 {offsets = [0, 1, 0], sizes = [10, 1, 32], strides = [1, 1, 1]} : vector<10x8x32xf32> to vector<10x1x32xf32>
    %33 = vector.broadcast %31 : vector<10x8x1xf32> to vector<10x8x32xf32>
    %34 = vector.broadcast %32 : vector<10x1x32xf32> to vector<10x8x32xf32>
    %35 = arith.mulf %33, %34 : vector<10x8x32xf32>
    %36 = arith.addf %24, %35 : vector<10x8x32xf32>
    %37 = vector.extract_strided_slice %1 {offsets = [0, 0, 1], sizes = [10, 8, 1], strides = [1, 1, 1]} : vector<10x8x8xf32> to vector<10x8x1xf32>
    %38 = vector.extract_strided_slice %16 {offsets = [0, 1, 0], sizes = [10, 1, 32], strides = [1, 1, 1]} : vector<10x8x32xf32> to vector<10x1x32xf32>
    %39 = vector.broadcast %37 : vector<10x8x1xf32> to vector<10x8x32xf32>
    %40 = vector.broadcast %38 : vector<10x1x32xf32> to vector<10x8x32xf32>
    %41 = arith.mulf %39, %40 : vector<10x8x32xf32>
    %42 = arith.addf %30, %41 : vector<10x8x32xf32>
    %43 = vector.extract_strided_slice %0 {offsets = [0, 0, 2], sizes = [10, 8, 1], strides = [1, 1, 1]} : vector<10x8x8xf32> to vector<10x8x1xf32>
    %44 = vector.extract_strided_slice %14 {offsets = [0, 2, 0], sizes = [10, 1, 32], strides = [1, 1, 1]} : vector<10x8x32xf32> to vector<10x1x32xf32>
    %45 = vector.broadcast %43 : vector<10x8x1xf32> to vector<10x8x32xf32>
    %46 = vector.broadcast %44 : vector<10x1x32xf32> to vector<10x8x32xf32>
    %47 = arith.mulf %45, %46 : vector<10x8x32xf32>
    %48 = arith.addf %36, %47 : vector<10x8x32xf32>
    %49 = vector.extract_strided_slice %1 {offsets = [0, 0, 2], sizes = [10, 8, 1], strides = [1, 1, 1]} : vector<10x8x8xf32> to vector<10x8x1xf32>
    %50 = vector.extract_strided_slice %16 {offsets = [0, 2, 0], sizes = [10, 1, 32], strides = [1, 1, 1]} : vector<10x8x32xf32> to vector<10x1x32xf32>
    %51 = vector.broadcast %49 : vector<10x8x1xf32> to vector<10x8x32xf32>
    %52 = vector.broadcast %50 : vector<10x1x32xf32> to vector<10x8x32xf32>
    %53 = arith.mulf %51, %52 : vector<10x8x32xf32>
    %54 = arith.addf %42, %53 : vector<10x8x32xf32>
    %55 = vector.extract_strided_slice %0 {offsets = [0, 0, 3], sizes = [10, 8, 1], strides = [1, 1, 1]} : vector<10x8x8xf32> to vector<10x8x1xf32>
    %56 = vector.extract_strided_slice %14 {offsets = [0, 3, 0], sizes = [10, 1, 32], strides = [1, 1, 1]} : vector<10x8x32xf32> to vector<10x1x32xf32>
    %57 = vector.broadcast %55 : vector<10x8x1xf32> to vector<10x8x32xf32>
    %58 = vector.broadcast %56 : vector<10x1x32xf32> to vector<10x8x32xf32>
    %59 = arith.mulf %57, %58 : vector<10x8x32xf32>
    %60 = arith.addf %48, %59 : vector<10x8x32xf32>
    %61 = vector.extract_strided_slice %1 {offsets = [0, 0, 3], sizes = [10, 8, 1], strides = [1, 1, 1]} : vector<10x8x8xf32> to vector<10x8x1xf32>
    %62 = vector.extract_strided_slice %16 {offsets = [0, 3, 0], sizes = [10, 1, 32], strides = [1, 1, 1]} : vector<10x8x32xf32> to vector<10x1x32xf32>
    %63 = vector.broadcast %61 : vector<10x8x1xf32> to vector<10x8x32xf32>
    %64 = vector.broadcast %62 : vector<10x1x32xf32> to vector<10x8x32xf32>
    %65 = arith.mulf %63, %64 : vector<10x8x32xf32>
    %66 = arith.addf %54, %65 : vector<10x8x32xf32>
    %67 = vector.extract_strided_slice %0 {offsets = [0, 0, 4], sizes = [10, 8, 1], strides = [1, 1, 1]} : vector<10x8x8xf32> to vector<10x8x1xf32>
    %68 = vector.extract_strided_slice %14 {offsets = [0, 4, 0], sizes = [10, 1, 32], strides = [1, 1, 1]} : vector<10x8x32xf32> to vector<10x1x32xf32>
    %69 = vector.broadcast %67 : vector<10x8x1xf32> to vector<10x8x32xf32>
    %70 = vector.broadcast %68 : vector<10x1x32xf32> to vector<10x8x32xf32>
    %71 = arith.mulf %69, %70 : vector<10x8x32xf32>
    %72 = arith.addf %60, %71 : vector<10x8x32xf32>
    %73 = vector.extract_strided_slice %1 {offsets = [0, 0, 4], sizes = [10, 8, 1], strides = [1, 1, 1]} : vector<10x8x8xf32> to vector<10x8x1xf32>
    %74 = vector.extract_strided_slice %16 {offsets = [0, 4, 0], sizes = [10, 1, 32], strides = [1, 1, 1]} : vector<10x8x32xf32> to vector<10x1x32xf32>
    %75 = vector.broadcast %73 : vector<10x8x1xf32> to vector<10x8x32xf32>
    %76 = vector.broadcast %74 : vector<10x1x32xf32> to vector<10x8x32xf32>
    %77 = arith.mulf %75, %76 : vector<10x8x32xf32>
    %78 = arith.addf %66, %77 : vector<10x8x32xf32>
    %79 = vector.extract_strided_slice %0 {offsets = [0, 0, 5], sizes = [10, 8, 1], strides = [1, 1, 1]} : vector<10x8x8xf32> to vector<10x8x1xf32>
    %80 = vector.extract_strided_slice %14 {offsets = [0, 5, 0], sizes = [10, 1, 32], strides = [1, 1, 1]} : vector<10x8x32xf32> to vector<10x1x32xf32>
    %81 = vector.broadcast %79 : vector<10x8x1xf32> to vector<10x8x32xf32>
    %82 = vector.broadcast %80 : vector<10x1x32xf32> to vector<10x8x32xf32>
    %83 = arith.mulf %81, %82 : vector<10x8x32xf32>
    %84 = arith.addf %72, %83 : vector<10x8x32xf32>
    %85 = vector.extract_strided_slice %1 {offsets = [0, 0, 5], sizes = [10, 8, 1], strides = [1, 1, 1]} : vector<10x8x8xf32> to vector<10x8x1xf32>
    %86 = vector.extract_strided_slice %16 {offsets = [0, 5, 0], sizes = [10, 1, 32], strides = [1, 1, 1]} : vector<10x8x32xf32> to vector<10x1x32xf32>
    %87 = vector.broadcast %85 : vector<10x8x1xf32> to vector<10x8x32xf32>
    %88 = vector.broadcast %86 : vector<10x1x32xf32> to vector<10x8x32xf32>
    %89 = arith.mulf %87, %88 : vector<10x8x32xf32>
    %90 = arith.addf %78, %89 : vector<10x8x32xf32>
    %91 = vector.extract_strided_slice %0 {offsets = [0, 0, 6], sizes = [10, 8, 1], strides = [1, 1, 1]} : vector<10x8x8xf32> to vector<10x8x1xf32>
    %92 = vector.extract_strided_slice %14 {offsets = [0, 6, 0], sizes = [10, 1, 32], strides = [1, 1, 1]} : vector<10x8x32xf32> to vector<10x1x32xf32>
    %93 = vector.broadcast %91 : vector<10x8x1xf32> to vector<10x8x32xf32>
    %94 = vector.broadcast %92 : vector<10x1x32xf32> to vector<10x8x32xf32>
    %95 = arith.mulf %93, %94 : vector<10x8x32xf32>
    %96 = arith.addf %84, %95 : vector<10x8x32xf32>
    %97 = vector.extract_strided_slice %1 {offsets = [0, 0, 6], sizes = [10, 8, 1], strides = [1, 1, 1]} : vector<10x8x8xf32> to vector<10x8x1xf32>
    %98 = vector.extract_strided_slice %16 {offsets = [0, 6, 0], sizes = [10, 1, 32], strides = [1, 1, 1]} : vector<10x8x32xf32> to vector<10x1x32xf32>
    %99 = vector.broadcast %97 : vector<10x8x1xf32> to vector<10x8x32xf32>
    %100 = vector.broadcast %98 : vector<10x1x32xf32> to vector<10x8x32xf32>
    %101 = arith.mulf %99, %100 : vector<10x8x32xf32>
    %102 = arith.addf %90, %101 : vector<10x8x32xf32>
    %103 = vector.extract_strided_slice %0 {offsets = [0, 0, 7], sizes = [10, 8, 1], strides = [1, 1, 1]} : vector<10x8x8xf32> to vector<10x8x1xf32>
    %104 = vector.extract_strided_slice %14 {offsets = [0, 7, 0], sizes = [10, 1, 32], strides = [1, 1, 1]} : vector<10x8x32xf32> to vector<10x1x32xf32>
    %105 = vector.broadcast %103 : vector<10x8x1xf32> to vector<10x8x32xf32>
    %106 = vector.broadcast %104 : vector<10x1x32xf32> to vector<10x8x32xf32>
    %107 = arith.mulf %105, %106 : vector<10x8x32xf32>
    %108 = arith.addf %96, %107 : vector<10x8x32xf32>
    %109 = vector.extract_strided_slice %1 {offsets = [0, 0, 7], sizes = [10, 8, 1], strides = [1, 1, 1]} : vector<10x8x8xf32> to vector<10x8x1xf32>
    %110 = vector.extract_strided_slice %16 {offsets = [0, 7, 0], sizes = [10, 1, 32], strides = [1, 1, 1]} : vector<10x8x32xf32> to vector<10x1x32xf32>
    %111 = vector.broadcast %109 : vector<10x8x1xf32> to vector<10x8x32xf32>
    %112 = vector.broadcast %110 : vector<10x1x32xf32> to vector<10x8x32xf32>
    %113 = arith.mulf %111, %112 : vector<10x8x32xf32>
    %114 = arith.addf %102, %113 : vector<10x8x32xf32>
    %115 = vector.shape_cast %108 : vector<10x8x32xf32> to vector<80x32xf32>
    %116 = vector.broadcast %7 : vector<1x32xf32> to vector<80x32xf32>
    %117 = arith.addf %115, %116 : vector<80x32xf32>
    %118 = vector.shape_cast %114 : vector<10x8x32xf32> to vector<80x32xf32>
    %119 = vector.broadcast %8 : vector<1x32xf32> to vector<80x32xf32>
    %120 = arith.addf %118, %119 : vector<80x32xf32>
    %cst_23 = arith.constant dense<0.000000e+00> : vector<80x96xf32>
    %121 = tpu.matmul %117, %4, %cst_23 {dimension_numbers = #tpu.dot_dimension_numbers<[1], [0], [0], [1], [0, 0, 1, 1], [], []>} : vector<80x32xf32>, vector<32x96xf32>, vector<80x96xf32> -> vector<80x96xf32>
    %cst_24 = arith.constant dense<0.000000e+00> : vector<80x96xf32>
    %122 = tpu.matmul %120, %5, %cst_24 {dimension_numbers = #tpu.dot_dimension_numbers<[1], [0], [0], [1], [0, 0, 1, 1], [], []>} : vector<80x32xf32>, vector<32x96xf32>, vector<80x96xf32> -> vector<80x96xf32>
    %123 = arith.addf %121, %122 : vector<80x96xf32>
    %124 = vector.broadcast %6 : vector<1x96xf32> to vector<80x96xf32>
    %125 = arith.addf %123, %124 : vector<80x96xf32>
    %126 = vector.extract_strided_slice %12 {offsets = [0, 64], sizes = [80, 32], strides = [1, 1]} : vector<80x160xf32> to vector<80x32xf32>
    %127 = vector.extract_strided_slice %12 {offsets = [0, 96], sizes = [80, 32], strides = [1, 1]} : vector<80x160xf32> to vector<80x32xf32>
    %128 = vector.extract_strided_slice %12 {offsets = [0, 128], sizes = [80, 32], strides = [1, 1]} : vector<80x160xf32> to vector<80x32xf32>
    %129 = vector.extract_strided_slice %125 {offsets = [0, 0], sizes = [80, 32], strides = [1, 1]} : vector<80x96xf32> to vector<80x32xf32>
    %130 = arith.addf %129, %126 : vector<80x32xf32>
    %131 = arith.negf %130 : vector<80x32xf32>
    %132 = math.exp %131 : vector<80x32xf32>
    %cst_25 = arith.constant 1.000000e+00 : f32
    %133 = vector.broadcast %cst_25 : f32 to vector<80x32xf32>
    %134 = arith.addf %133, %132 : vector<80x32xf32>
    %135 = arith.divf %133, %134 : vector<80x32xf32>
    %136 = vector.extract_strided_slice %125 {offsets = [0, 32], sizes = [80, 32], strides = [1, 1]} : vector<80x96xf32> to vector<80x32xf32>
    %137 = arith.addf %136, %127 : vector<80x32xf32>
    %138 = arith.negf %137 : vector<80x32xf32>
    %139 = math.exp %138 : vector<80x32xf32>
    %cst_26 = arith.constant 1.000000e+00 : f32
    %140 = vector.broadcast %cst_26 : f32 to vector<80x32xf32>
    %141 = arith.addf %140, %139 : vector<80x32xf32>
    %142 = arith.divf %140, %141 : vector<80x32xf32>
    %143 = vector.extract_strided_slice %125 {offsets = [0, 64], sizes = [80, 32], strides = [1, 1]} : vector<80x96xf32> to vector<80x32xf32>
    %144 = arith.mulf %135, %128 : vector<80x32xf32>
    %145 = arith.addf %143, %144 : vector<80x32xf32>
    %146 = math.tanh %145 : vector<80x32xf32>
    %147 = arith.subf %9, %146 : vector<80x32xf32>
    %148 = arith.mulf %142, %147 : vector<80x32xf32>
    %149 = arith.addf %146, %148 : vector<80x32xf32>
    %c0_27 = arith.constant 0 : index
    %c0_28 = arith.constant 0 : index
    %150 = vector.load %arg11[%c0_27, %c0_28] : memref<80x32xf32, #tpu.memory_space<vmem>>, vector<80x32xf32>
    tpu.vector_store %arg11[%c0_27, %c0_28], %149 {strides = array<i32>} : memref<80x32xf32, #tpu.memory_space<vmem>>, vector<80x32xf32>,
    return
  }
  func.func @transform_0(%arg0: i32) -> (i32, i32, i32) {
    %c0_i32 = arith.constant 0 : i32
    %c0_i32_0 = arith.constant 0 : i32
    %c0_i32_1 = arith.constant 0 : i32
    return %arg0, %c0_i32, %c0_i32_0 : i32, i32, i32
  }
  func.func @transform_1(%arg0: i32) -> (i32, i32, i32) {
    %c0_i32 = arith.constant 0 : i32
    %c0_i32_0 = arith.constant 0 : i32
    %c0_i32_1 = arith.constant 0 : i32
    return %arg0, %c0_i32, %c0_i32_0 : i32, i32, i32
  }
  func.func @transform_2(%arg0: i32) -> (i32, i32) {
    %c0_i32 = arith.constant 0 : i32
    %c0_i32_0 = arith.constant 0 : i32
    return %arg0, %c0_i32 : i32, i32
  }
  func.func @transform_3(%arg0: i32) -> (i32, i32) {
    %c0_i32 = arith.constant 0 : i32
    %c0_i32_0 = arith.constant 0 : i32
    %c0_i32_1 = arith.constant 0 : i32
    return %c0_i32, %c0_i32_0 : i32, i32
  }
  func.func @transform_4(%arg0: i32) -> (i32, i32) {
    %c0_i32 = arith.constant 0 : i32
    %c0_i32_0 = arith.constant 0 : i32
    %c0_i32_1 = arith.constant 0 : i32
    return %c0_i32, %c0_i32_0 : i32, i32
  }
  func.func @transform_5(%arg0: i32) -> (i32, i32) {
    %c0_i32 = arith.constant 0 : i32
    %c0_i32_0 = arith.constant 0 : i32
    %c0_i32_1 = arith.constant 0 : i32
    return %c0_i32, %c0_i32_0 : i32, i32
  }
  func.func @transform_6(%arg0: i32) -> (i32, i32) {
    %c0_i32 = arith.constant 0 : i32
    %c0_i32_0 = arith.constant 0 : i32
    %c0_i32_1 = arith.constant 0 : i32
    return %c0_i32, %c0_i32_0 : i32, i32
  }
  func.func @transform_7(%arg0: i32) -> (i32, i32) {
    %c0_i32 = arith.constant 0 : i32
    %c0_i32_0 = arith.constant 0 : i32
    %c0_i32_1 = arith.constant 0 : i32
    return %c0_i32, %c0_i32_0 : i32, i32
  }
  func.func @transform_8(%arg0: i32) -> (i32, i32) {
    %c0_i32 = arith.constant 0 : i32
    %c0_i32_0 = arith.constant 0 : i32
    %c0_i32_1 = arith.constant 0 : i32
    return %c0_i32, %c0_i32_0 : i32, i32
  }
  func.func @transform_9(%arg0: i32) -> (i32, i32) {
    %c0_i32 = arith.constant 0 : i32
    %c0_i32_0 = arith.constant 0 : i32
    %c0_i32_1 = arith.constant 0 : i32
    return %c0_i32, %c0_i32_0 : i32, i32
  }
  func.func @transform_10(%arg0: i32) -> (i32, i32) {
    %c0_i32 = arith.constant 0 : i32
    %c0_i32_0 = arith.constant 0 : i32
    return %arg0, %c0_i32 : i32, i32
  }
}

</mosaic_0001>

<llo_original>
// kernel: tpu_custom_call.1
$region0: #{tpu_custom_call.1}
  #allocation0 [shape = 'u32[]', space=smem, size = 0x4, offset = 0x4, fixed_abs, tag = 'smem constant byte address 0x4 - core index']
  #allocation1 [shape = 'u32[144,128]{1,0:T(1,128)}', space=vmem, size = 0x12000, scoped, tag = 'internal scratch']
  %s0 = inlined_call_operand.vmem [shape: f32[20,8,8], index: 0, kind: input, shape index: {}]
  %s1 = inlined_call_operand.vmem [shape: f32[20,8,8], index: 1, kind: input, shape index: {}]
  %s2 = inlined_call_operand.vmem [shape: f32[160,32], index: 2, kind: input, shape index: {}]
  %s3 = inlined_call_operand.vmem [shape: f32[32,160], index: 3, kind: input, shape index: {}]
  %s4 = inlined_call_operand.vmem [shape: f32[1,160], index: 4, kind: input, shape index: {}]
  %s5 = inlined_call_operand.vmem [shape: f32[32,96], index: 5, kind: input, shape index: {}]
  %s6 = inlined_call_operand.vmem [shape: f32[32,96], index: 6, kind: input, shape index: {}]
  %s7 = inlined_call_operand.vmem [shape: f32[1,96], index: 7, kind: input, shape index: {}]
  %s8 = inlined_call_operand.vmem [shape: f32[1,32], index: 8, kind: input, shape index: {}]
  %s9 = inlined_call_operand.vmem [shape: f32[1,32], index: 9, kind: input, shape index: {}]
  %s10 = inlined_call_operand.vmem [shape: f32[160,32], index: 10, kind: output, shape index: {}]
  %s11 = sld [smem:[#allocation0]]
  $region73: #{tpu_custom_call.1} parent=0
    _
  %s13 = ssub.s32 1, %s11
  %s14 = scalar_select 0, %s13, %s11
  loop: start=0, step=1, limit=4
  $region2: #{tpu_custom_call.1} parent=0 // loop_pre_header
    _
  $region3: #{tpu_custom_call.1} parent=0 // loop_header
    %s16 = sphi 0, %s20
    %p17 = scmp.ge.s32.totalorder %s16, 4
    %s26 = sphi 0, %s28
    %s29 = sphi 0, %s26
    %s30 = sphi 0, %s29
    %s46 = sphi 0, %s30
    %s52 = sphi 0, %s54
    %s55 = sphi 0, %s52
    %s56 = sphi 0, %s55
    %s72 = sphi 0, %s56
    %s78 = sphi 0, %s80
    %s81 = sphi 0, %s78
    %s82 = sphi 0, %s81
    %s98 = sphi 0, %s82
    %s102 = sphi 0, %s102
    %s104 = sphi 0, %s102
    %s105 = sphi 0, %s104
    %s119 = sphi 0, %s105
    %s123 = sphi 0, %s123
    %s125 = sphi 0, %s123
    %s126 = sphi 0, %s125
    %s140 = sphi 0, %s126
    %s144 = sphi 0, %s144
    %s146 = sphi 0, %s144
    %s147 = sphi 0, %s146
    %s161 = sphi 0, %s147
    %s165 = sphi 0, %s165
    %s167 = sphi 0, %s165
    %s168 = sphi 0, %s167
    %s182 = sphi 0, %s168
    %s186 = sphi 0, %s186
    %s188 = sphi 0, %s186
    %s189 = sphi 0, %s188
    %s203 = sphi 0, %s189
    %s207 = sphi 0, %s207
    %s209 = sphi 0, %s207
    %s210 = sphi 0, %s209
    %s224 = sphi 0, %s210
    %s228 = sphi 0, %s228
    %s230 = sphi 0, %s228
    %s231 = sphi 0, %s230
    %s245 = sphi 0, %s231
    %s251 = sphi 0, %s253
    %s254 = sphi 0, %s251
    %s255 = sphi 0, %s254
    %s271 = sphi 0, %s255
  $region4: #{tpu_custom_call.1} parent=0 // loop_header_branch
    %19 = sbr.rel (%p17) target = $region8
  $region5: #{tpu_custom_call.1} parent=0 // loop_body
    %s21 = ssub.s32 %s16, 1
    %s22 = ssub.s32 %s16, 2
    %s23 = sadd.s32 %s16, 1
    %s24 = ssub.s32 %s16, %s23
    %p25 = scmp.eq.s32.totalorder %s24, 0
    %s27 = sadd.s32 %s26, 1
    %s28 = scalar_select %p25, %s26, %s27
    %p31 = pneg %p25
    %p32 = scmp.eq.s32.totalorder %s16, 1
    %p33 = por %p31, %p32
    %p34 = scmp.ne.s32.totalorder %s26, %s29
    %p35 = scmp.eq.s32.totalorder %s16, 0
    %p36 = por %p34, %p35
    %p37 = scmp.ne.s32.totalorder %s26, %s29
    %p38 = scmp.eq.s32.totalorder %s21, 1
    %p39 = por %p37, %p38
    %p40 = scmp.ne.s32.totalorder %s29, %s30
    %p41 = scmp.eq.s32.totalorder %s21, 0
    %p42 = por %p40, %p41
    %p43 = scmp.ne.s32.totalorder %s29, %s30
    %p44 = scmp.eq.s32.totalorder %s22, 1
    %p45 = por %p43, %p44
    %p47 = scmp.ne.s32.totalorder %s30, %s46
    %p48 = scmp.eq.s32.totalorder %s22, 0
    %p49 = por %p47, %p48
    %s50 = ssub.s32 %s16, %s23
    %p51 = scmp.eq.s32.totalorder %s50, 0
    %s53 = sadd.s32 %s52, 1
    %s54 = scalar_select %p51, %s52, %s53
    %p57 = pneg %p51
    %p58 = scmp.eq.s32.totalorder %s16, 1
    %p59 = por %p57, %p58
    %p60 = scmp.ne.s32.totalorder %s52, %s55
    %p61 = scmp.eq.s32.totalorder %s16, 0
    %p62 = por %p60, %p61
    %p63 = scmp.ne.s32.totalorder %s52, %s55
    %p64 = scmp.eq.s32.totalorder %s21, 1
    %p65 = por %p63, %p64
    %p66 = scmp.ne.s32.totalorder %s55, %s56
    %p67 = scmp.eq.s32.totalorder %s21, 0
    %p68 = por %p66, %p67
    %p69 = scmp.ne.s32.totalorder %s55, %s56
    %p70 = scmp.eq.s32.totalorder %s22, 1
    %p71 = por %p69, %p70
    %p73 = scmp.ne.s32.totalorder %s56, %s72
    %p74 = scmp.eq.s32.totalorder %s22, 0
    %p75 = por %p73, %p74
    %s76 = ssub.s32 %s16, %s23
    %p77 = scmp.eq.s32.totalorder %s76, 0
    %s79 = sadd.s32 %s78, 1
    %s80 = scalar_select %p77, %s78, %s79
    %p83 = pneg %p77
    %p84 = scmp.eq.s32.totalorder %s16, 1
    %p85 = por %p83, %p84
    %p86 = scmp.ne.s32.totalorder %s78, %s81
    %p87 = scmp.eq.s32.totalorder %s16, 0
    %p88 = por %p86, %p87
    %p89 = scmp.ne.s32.totalorder %s78, %s81
    %p90 = scmp.eq.s32.totalorder %s21, 1
    %p91 = por %p89, %p90
    %p92 = scmp.ne.s32.totalorder %s81, %s82
    %p93 = scmp.eq.s32.totalorder %s21, 0
    %p94 = por %p92, %p93
    %p95 = scmp.ne.s32.totalorder %s81, %s82
    %p96 = scmp.eq.s32.totalorder %s22, 1
    %p97 = por %p95, %p96
    %p99 = scmp.ne.s32.totalorder %s82, %s98
    %p100 = scmp.eq.s32.totalorder %s22, 0
    %p101 = por %p99, %p100
    %s103 = sadd.s32 %s102, 1
    %p106 = scmp.eq.s32.totalorder %s16, 1
    %p107 = scmp.ne.s32.totalorder %s102, %s104
    %p108 = scmp.eq.s32.totalorder %s16, 0
    %p109 = por %p107, %p108
    %p110 = scmp.ne.s32.totalorder %s102, %s104
    %p111 = scmp.eq.s32.totalorder %s21, 1
    %p112 = por %p110, %p111
    %p113 = scmp.ne.s32.totalorder %s104, %s105
    %p114 = scmp.eq.s32.totalorder %s21, 0
    %p115 = por %p113, %p114
    %p116 = scmp.ne.s32.totalorder %s104, %s105
    %p117 = scmp.eq.s32.totalorder %s22, 1
    %p118 = por %p116, %p117
    %p120 = scmp.ne.s32.totalorder %s105, %s119
    %p121 = scmp.eq.s32.totalorder %s22, 0
    %p122 = por %p120, %p121
    %s124 = sadd.s32 %s123, 1
    %p127 = scmp.eq.s32.totalorder %s16, 1
    %p128 = scmp.ne.s32.totalorder %s123, %s125
    %p129 = scmp.eq.s32.totalorder %s16, 0
    %p130 = por %p128, %p129
    %p131 = scmp.ne.s32.totalorder %s123, %s125
    %p132 = scmp.eq.s32.totalorder %s21, 1
    %p133 = por %p131, %p132
    %p134 = scmp.ne.s32.totalorder %s125, %s126
    %p135 = scmp.eq.s32.totalorder %s21, 0
    %p136 = por %p134, %p135
    %p137 = scmp.ne.s32.totalorder %s125, %s126
    %p138 = scmp.eq.s32.totalorder %s22, 1
    %p139 = por %p137, %p138
    %p141 = scmp.ne.s32.totalorder %s126, %s140
    %p142 = scmp.eq.s32.totalorder %s22, 0
    %p143 = por %p141, %p142
    %s145 = sadd.s32 %s144, 1
    %p148 = scmp.eq.s32.totalorder %s16, 1
    %p149 = scmp.ne.s32.totalorder %s144, %s146
    %p150 = scmp.eq.s32.totalorder %s16, 0
    %p151 = por %p149, %p150
    %p152 = scmp.ne.s32.totalorder %s144, %s146
    %p153 = scmp.eq.s32.totalorder %s21, 1
    %p154 = por %p152, %p153
    %p155 = scmp.ne.s32.totalorder %s146, %s147
    %p156 = scmp.eq.s32.totalorder %s21, 0
    %p157 = por %p155, %p156
    %p158 = scmp.ne.s32.totalorder %s146, %s147
    %p159 = scmp.eq.s32.totalorder %s22, 1
    %p160 = por %p158, %p159
    %p162 = scmp.ne.s32.totalorder %s147, %s161
    %p163 = scmp.eq.s32.totalorder %s22, 0
    %p164 = por %p162, %p163
    %s166 = sadd.s32 %s165, 1
    %p169 = scmp.eq.s32.totalorder %s16, 1
    %p170 = scmp.ne.s32.totalorder %s165, %s167
    %p171 = scmp.eq.s32.totalorder %s16, 0
    %p172 = por %p170, %p171
    %p173 = scmp.ne.s32.totalorder %s165, %s167
    %p174 = scmp.eq.s32.totalorder %s21, 1
    %p175 = por %p173, %p174
    %p176 = scmp.ne.s32.totalorder %s167, %s168
    %p177 = scmp.eq.s32.totalorder %s21, 0
    %p178 = por %p176, %p177
    %p179 = scmp.ne.s32.totalorder %s167, %s168
    %p180 = scmp.eq.s32.totalorder %s22, 1
    %p181 = por %p179, %p180
    %p183 = scmp.ne.s32.totalorder %s168, %s182
    %p184 = scmp.eq.s32.totalorder %s22, 0
    %p185 = por %p183, %p184
    %s187 = sadd.s32 %s186, 1
    %p190 = scmp.eq.s32.totalorder %s16, 1
    %p191 = scmp.ne.s32.totalorder %s186, %s188
    %p192 = scmp.eq.s32.totalorder %s16, 0
    %p193 = por %p191, %p192
    %p194 = scmp.ne.s32.totalorder %s186, %s188
    %p195 = scmp.eq.s32.totalorder %s21, 1
    %p196 = por %p194, %p195
    %p197 = scmp.ne.s32.totalorder %s188, %s189
    %p198 = scmp.eq.s32.totalorder %s21, 0
    %p199 = por %p197, %p198
    %p200 = scmp.ne.s32.totalorder %s188, %s189
    %p201 = scmp.eq.s32.totalorder %s22, 1
    %p202 = por %p200, %p201
    %p204 = scmp.ne.s32.totalorder %s189, %s203
    %p205 = scmp.eq.s32.totalorder %s22, 0
    %p206 = por %p204, %p205
    %s208 = sadd.s32 %s207, 1
    %p211 = scmp.eq.s32.totalorder %s16, 1
    %p212 = scmp.ne.s32.totalorder %s207, %s209
    %p213 = scmp.eq.s32.totalorder %s16, 0
    %p214 = por %p212, %p213
    %p215 = scmp.ne.s32.totalorder %s207, %s209
    %p216 = scmp.eq.s32.totalorder %s21, 1
    %p217 = por %p215, %p216
    %p218 = scmp.ne.s32.totalorder %s209, %s210
    %p219 = scmp.eq.s32.totalorder %s21, 0
    %p220 = por %p218, %p219
    %p221 = scmp.ne.s32.totalorder %s209, %s210
    %p222 = scmp.eq.s32.totalorder %s22, 1
    %p223 = por %p221, %p222
    %p225 = scmp.ne.s32.totalorder %s210, %s224
    %p226 = scmp.eq.s32.totalorder %s22, 0
    %p227 = por %p225, %p226
    %s229 = sadd.s32 %s228, 1
    %p232 = scmp.eq.s32.totalorder %s16, 1
    %p233 = scmp.ne.s32.totalorder %s228, %s230
    %p234 = scmp.eq.s32.totalorder %s16, 0
    %p235 = por %p233, %p234
    %p236 = scmp.ne.s32.totalorder %s228, %s230
    %p237 = scmp.eq.s32.totalorder %s21, 1
    %p238 = por %p236, %p237
    %p239 = scmp.ne.s32.totalorder %s230, %s231
    %p240 = scmp.eq.s32.totalorder %s21, 0
    %p241 = por %p239, %p240
    %p242 = scmp.ne.s32.totalorder %s230, %s231
    %p243 = scmp.eq.s32.totalorder %s22, 1
    %p244 = por %p242, %p243
    %p246 = scmp.ne.s32.totalorder %s231, %s245
    %p247 = scmp.eq.s32.totalorder %s22, 0
    %p248 = por %p246, %p247
    %s249 = ssub.s32 %s16, %s23
    %p250 = scmp.eq.s32.totalorder %s249, 0
    %s252 = sadd.s32 %s251, 1
    %s253 = scalar_select %p250, %s251, %s252
    %p256 = pneg %p250
    %p257 = scmp.eq.s32.totalorder %s16, 1
    %p258 = por %p256, %p257
    %p259 = scmp.ne.s32.totalorder %s251, %s254
    %p260 = scmp.eq.s32.totalorder %s16, 0
    %p261 = por %p259, %p260
    %p262 = scmp.ne.s32.totalorder %s251, %s254
    %p263 = scmp.eq.s32.totalorder %s21, 1
    %p264 = por %p262, %p263
    %p265 = scmp.ne.s32.totalorder %s254, %s255
    %p266 = scmp.eq.s32.totalorder %s21, 0
    %p267 = por %p265, %p266
    %p268 = scmp.ne.s32.totalorder %s254, %s255
    %p269 = scmp.eq.s32.totalorder %s22, 1
    %p270 = por %p268, %p269
    %p272 = scmp.ne.s32.totalorder %s255, %s271
    %p273 = scmp.eq.s32.totalorder %s22, 0
    %p274 = por %p272, %p273
    %p275 = scmp.le.s32.totalorder 1, %s16
    %p276 = scmp.lt.s32.totalorder %s16, 3
    %p277 = pnand %p275, %p276
    %p278 = pneg %p277
    // Predicated region
    $region9: #{tpu_custom_call.1} parent=5 // pred_check
      _
    $region10: #{tpu_custom_call.1} parent=5 // pred_check_branch
      %280 = sbr.rel (%p277) target = $region12
    $region11: #{tpu_custom_call.1} parent=5 // pred_region
      %s281 = ssub.s32 %s16, 1
      // Predicated region
      $region13: #{tpu_custom_call.1} parent=11 // pred_check
        %p282 = pneg %p115
      $region14: #{tpu_custom_call.1} parent=11 // pred_check_branch
        %284 = sbr.rel (%p282) target = $region16
      $region15: #{tpu_custom_call.1} parent=11 // pred_region
        _
      $region16: #{tpu_custom_call.1} parent=11 // pred_fallthru
        _
      // Predicated region
      $region17: #{tpu_custom_call.1} parent=11 // pred_check
        %p285 = pneg %p136
      $region18: #{tpu_custom_call.1} parent=11 // pred_check_branch
        %287 = sbr.rel (%p285) target = $region20
      $region19: #{tpu_custom_call.1} parent=11 // pred_region
        _
      $region20: #{tpu_custom_call.1} parent=11 // pred_fallthru
        _
      // Predicated region
      $region21: #{tpu_custom_call.1} parent=11 // pred_check
        %p288 = pneg %p157
      $region22: #{tpu_custom_call.1} parent=11 // pred_check_branch
        %290 = sbr.rel (%p288) target = $region24
      $region23: #{tpu_custom_call.1} parent=11 // pred_region
        _
      $region24: #{tpu_custom_call.1} parent=11 // pred_fallthru
        _
      // Predicated region
      $region25: #{tpu_custom_call.1} parent=11 // pred_check
        %p291 = pneg %p178
      $region26: #{tpu_custom_call.1} parent=11 // pred_check_branch
        %293 = sbr.rel (%p291) target = $region28
      $region27: #{tpu_custom_call.1} parent=11 // pred_region
        _
      $region28: #{tpu_custom_call.1} parent=11 // pred_fallthru
        _
      // Predicated region
      $region29: #{tpu_custom_call.1} parent=11 // pred_check
        %p294 = pneg %p199
      $region30: #{tpu_custom_call.1} parent=11 // pred_check_branch
        %296 = sbr.rel (%p294) target = $region32
      $region31: #{tpu_custom_call.1} parent=11 // pred_region
        _
      $region32: #{tpu_custom_call.1} parent=11 // pred_fallthru
        _
      // Predicated region
      $region33: #{tpu_custom_call.1} parent=11 // pred_check
        %p297 = pneg %p220
      $region34: #{tpu_custom_call.1} parent=11 // pred_check_branch
        %299 = sbr.rel (%p297) target = $region36
      $region35: #{tpu_custom_call.1} parent=11 // pred_region
        _
      $region36: #{tpu_custom_call.1} parent=11 // pred_fallthru
        _
      // Predicated region
      $region37: #{tpu_custom_call.1} parent=11 // pred_check
        %p300 = pneg %p241
      $region38: #{tpu_custom_call.1} parent=11 // pred_check_branch
        %302 = sbr.rel (%p300) target = $region40
      $region39: #{tpu_custom_call.1} parent=11 // pred_region
        _
      $region40: #{tpu_custom_call.1} parent=11 // pred_fallthru
        _
    $region12: #{tpu_custom_call.1} parent=5 // pred_fallthru
      _
    %p303 = scmp.lt.s32.totalorder %s16, 2
    // Predicated region
    $region41: #{tpu_custom_call.1} parent=5 // pred_check
      %p304 = pneg %p303
    $region42: #{tpu_custom_call.1} parent=5 // pred_check_branch
      %306 = sbr.rel (%p304) target = $region44
    $region43: #{tpu_custom_call.1} parent=5 // pred_region
      // Predicated region
      $region45: #{tpu_custom_call.1} parent=43 // pred_check
        %p307 = pneg %p36
      $region46: #{tpu_custom_call.1} parent=43 // pred_check_branch
        %309 = sbr.rel (%p307) target = $region48
      $region47: #{tpu_custom_call.1} parent=43 // pred_region
        %s310 = smul.u32 10, %s16
        %p311 = scmp.lt.s32.totalorder %s310, 19
        %s312 = scalar_select %p311, %s310, 19
        %s313 = smul.addr %s312, 8
        %s314 = scalar_lea.vmem %s0, %s313
        %s315 = smul.u32 10, %s16
      $region48: #{tpu_custom_call.1} parent=43 // pred_fallthru
        _
      // Predicated region
      $region49: #{tpu_custom_call.1} parent=43 // pred_check
        %p316 = pneg %p62
      $region50: #{tpu_custom_call.1} parent=43 // pred_check_branch
        %318 = sbr.rel (%p316) target = $region52
      $region51: #{tpu_custom_call.1} parent=43 // pred_region
        %s319 = smul.u32 10, %s16
        %p320 = scmp.lt.s32.totalorder %s319, 19
        %s321 = scalar_select %p320, %s319, 19
        %s322 = smul.addr %s321, 8
        %s323 = scalar_lea.vmem %s1, %s322
        %s324 = smul.u32 10, %s16
      $region52: #{tpu_custom_call.1} parent=43 // pred_fallthru
        _
      // Predicated region
      $region53: #{tpu_custom_call.1} parent=43 // pred_check
        %p325 = pneg %p88
      $region54: #{tpu_custom_call.1} parent=43 // pred_check_branch
        %327 = sbr.rel (%p325) target = $region56
      $region55: #{tpu_custom_call.1} parent=43 // pred_region
        %s328 = smul.u32 10, %s16
        %p329 = scmp.lt.s32.totalorder %s328, 19
        %s330 = scalar_select %p329, %s328, 19
        %s331 = smul.addr %s330, 8
        %s332 = scalar_lea.vmem %s2, %s331
        %s333 = smul.u32 10, %s16
      $region56: #{tpu_custom_call.1} parent=43 // pred_fallthru
        _
    $region44: #{tpu_custom_call.1} parent=5 // pred_fallthru
      _
    %p334 = scmp.le.s32.totalorder 1, %s16
    %p335 = scmp.lt.s32.totalorder %s16, 3
    %p336 = pnand %p334, %p335
    %p337 = pneg %p336
    // Predicated region
    $region57: #{tpu_custom_call.1} parent=5 // pred_check
      _
    $region58: #{tpu_custom_call.1} parent=5 // pred_check_branch
      %339 = sbr.rel (%p336) target = $region60
    $region59: #{tpu_custom_call.1} parent=5 // pred_region
      %s340 = ssub.s32 %s16, 1
      %s341 = smul.u32 10, %s21
      %p342 = scmp.lt.s32.totalorder %s341, 19
      %s343 = scalar_select %p342, %s341, 19
      %s344 = smul.addr %s343, 8
      %s345 = scalar_lea.vmem %s0, %s344
      %p346 = pneg %p42
      %p347 = pneg %p39
      %s348 = smul.u32 10, %s21
      %p349 = scmp.lt.s32.totalorder %s348, 19
      %s350 = scalar_select %p349, %s348, 19
      %s351 = smul.addr %s350, 8
      %s352 = scalar_lea.vmem %s1, %s351
      %p353 = pneg %p68
      %p354 = pneg %p65
      %s355 = smul.u32 10, %s21
      %p356 = scmp.lt.s32.totalorder %s355, 19
      %s357 = scalar_select %p356, %s355, 19
      %s358 = smul.addr %s357, 8
      %s359 = scalar_lea.vmem %s2, %s358
      %p360 = pneg %p94
      %p361 = pneg %p91
      %p362 = pneg %p115
      %p363 = pneg %p112
      %p364 = pneg %p136
      %p365 = pneg %p133
      %p366 = pneg %p157
      %p367 = pneg %p154
      %p368 = pneg %p178
      %p369 = pneg %p175
      %p370 = pneg %p199
      %p371 = pneg %p196
      %p372 = pneg %p220
      %p373 = pneg %p217
      %p374 = pneg %p241
      %p375 = pneg %p238
      %p376 = pneg %p267
      %p377 = pneg %p264
      %s378 = smul.u32 10, %s21
      %p379 = scmp.lt.s32.totalorder %s378, 19
      %s380 = scalar_select %p379, %s378, 19
      %s381 = smul.addr %s380, 8
      %s382 = scalar_lea.vmem %s10, %s381
      %s383 = smul.u32 10, %s21
      %p384 = scmp.lt.s32.totalorder %s383, 19
      %s385 = scalar_select %p384, %s383, 19
      %s386 = smul.addr %s385, 8
      %s387 = scalar_lea.vmem %s0, %s386
      %s388 = smul.u32 10, %s21
      %s389 = smul.u32 10, %s21
      %p390 = scmp.lt.s32.totalorder %s389, 19
      %s391 = scalar_select %p390, %s389, 19
      %s392 = smul.addr %s391, 8
      %s393 = scalar_lea.vmem %s1, %s392
      %s394 = smul.u32 10, %s21
      %s395 = smul.u32 10, %s21
      %p396 = scmp.lt.s32.totalorder %s395, 19
      %s397 = scalar_select %p396, %s395, 19
      %s398 = smul.addr %s397, 8
      %s399 = scalar_lea.vmem %s2, %s398
      %s400 = smul.u32 10, %s21
      %s401 = smul.u32 10, %s21
      %p402 = scmp.lt.s32.totalorder %s401, 19
      %s403 = scalar_select %p402, %s401, 19
      %s404 = smul.addr %s403, 8
      %s405 = scalar_lea.vmem %s10, %s404
      %s406 = smul.u32 10, %s21
      %v407 = vld [vmem:[%s387] sm:$0xff]
      %v408 = vld [vmem:[%s387 + $0x8] sm:$0xff]
      %v409 = vld [vmem:[%s387 + $0x10] sm:$0xff]
      %v410 = vld [vmem:[%s387 + $0x18] sm:$0xff]
      %v411 = vld [vmem:[%s387 + $0x20] sm:$0xff]
      %v412 = vld [vmem:[%s387 + $0x28] sm:$0xff]
      %v413 = vld [vmem:[%s387 + $0x30] sm:$0xff]
      %v414 = vld [vmem:[%s387 + $0x38] sm:$0xff]
      %v415 = vld [vmem:[%s387 + $0x40] sm:$0xff]
      %v416 = vld [vmem:[%s387 + $0x48] sm:$0xff]
      %v417 = vld [vmem:[%s393] sm:$0xff]
      %v418 = vld [vmem:[%s393 + $0x8] sm:$0xff]
      %v419 = vld [vmem:[%s393 + $0x10] sm:$0xff]
      %v420 = vld [vmem:[%s393 + $0x18] sm:$0xff]
      %v421 = vld [vmem:[%s393 + $0x20] sm:$0xff]
      %v422 = vld [vmem:[%s393 + $0x28] sm:$0xff]
      %v423 = vld [vmem:[%s393 + $0x30] sm:$0xff]
      %v424 = vld [vmem:[%s393 + $0x38] sm:$0xff]
      %v425 = vld [vmem:[%s393 + $0x40] sm:$0xff]
      %v426 = vld [vmem:[%s393 + $0x48] sm:$0xff]
      %v427 = vld [vmem:[%s3] sm:$0xff]
      %v428 = vld [vmem:[%s3 + $0x8] sm:$0xff]
      %v429 = vld [vmem:[%s3 + $0x10] sm:$0xff]
      %v430 = vld [vmem:[%s3 + $0x18] sm:$0xff]
      %v431 = vld [vmem:[%s3 + $0x20] sm:$0xff]
      %v432 = vld [vmem:[%s3 + $0x28] sm:$0xff]
      %v433 = vld [vmem:[%s3 + $0x30] sm:$0xff]
      %v434 = vld [vmem:[%s3 + $0x38] sm:$0xff]
      %v435 = vld [vmem:[%s4] sm:$0x3]
      %v436 = vld [vmem:[%s5] sm:$0xff]
      %v437 = vld [vmem:[%s5 + $0x8] sm:$0xff]
      %v438 = vld [vmem:[%s5 + $0x10] sm:$0xff]
      %v439 = vld [vmem:[%s5 + $0x18] sm:$0xff]
      %v440 = vld [vmem:[%s6] sm:$0xff]
      %v441 = vld [vmem:[%s6 + $0x8] sm:$0xff]
      %v442 = vld [vmem:[%s6 + $0x10] sm:$0xff]
      %v443 = vld [vmem:[%s6 + $0x18] sm:$0xff]
      %v444 = vld [vmem:[%s7] sm:$0x1]
      %v445 = vld [vmem:[%s8] sm:$0x1]
      %v446 = vld [vmem:[%s9] sm:$0x1]
      %v447 = vld [vmem:[%s399] sm:$0xff]
      %v448 = vld [vmem:[%s399 + $0x8] sm:$0xff]
      %v449 = vld [vmem:[%s399 + $0x10] sm:$0xff]
      %v450 = vld [vmem:[%s399 + $0x18] sm:$0xff]
      %v451 = vld [vmem:[%s399 + $0x20] sm:$0xff]
      %v452 = vld [vmem:[%s399 + $0x28] sm:$0xff]
      %v453 = vld [vmem:[%s399 + $0x30] sm:$0xff]
      %v454 = vld [vmem:[%s399 + $0x38] sm:$0xff]
      %v455 = vld [vmem:[%s399 + $0x40] sm:$0xff]
      %v456 = vld [vmem:[%s399 + $0x48] sm:$0xff]
      %v458 = vlaneseq
      %v459 = vshrl.u32 %v458, 7
      %v460 = vsub.s32 0, %v459
      %v461 = vrot.slane %v435, %v460
      %v462 = vlaneseq
      %v463 = vshrl.u32 %v462, 7
      %v464 = vsub.s32 1, %v463
      %v465 = vrot.slane %v435, %v464
      %vm468 = vcmask 261120
      %v470 = vsel %vm468, %v447, 0
      %v473 = vsel %vm468, %v448, 0
      %v476 = vsel %vm468, %v449, 0
      %v479 = vsel %vm468, %v450, 0
      %v482 = vsel %vm468, %v451, 0
      %v485 = vsel %vm468, %v452, 0
      %v488 = vsel %vm468, %v453, 0
      %v491 = vsel %vm468, %v454, 0
      %v494 = vsel %vm468, %v455, 0
      %v497 = vsel %vm468, %v456, 0
      %499 = vmatprep.subr.mxu0 %v428
      %500 = vmatpush1.msra.mxu0 %v427
      %501 = vmatprep.subr.mxu0 %v430
      %502 = vmatpush1.msra.mxu0 %v429
      %503 = vmatprep.subr.mxu0 %v432
      %504 = vmatpush1.msra.mxu0 %v431
      %505 = vmatprep.subr.mxu0 %v434
      %506 = vmatpush1.msra.mxu0 %v433
      %507 = vmatprep.subr.mxu0 0.0
      %508 = vmatpush1.msra.mxu0 0.0
      %509 = vmatprep.subr.mxu0 0.0
      %510 = vmatpush1.msra.mxu0 0.0
      %511 = vmatprep.subr.mxu0 0.0
      %512 = vmatpush1.msra.mxu0 0.0
      %513 = vmatprep.subr.mxu0 0.0
      %514 = vmatpush1.msra.mxu0 0.0
      %515 = vmatprep.subr.mxu0 0.0
      %516 = vmatpush1.msra.mxu0 0.0
      %517 = vmatprep.subr.mxu0 0.0
      %518 = vmatpush1.msra.mxu0 0.0
      %519 = vmatprep.subr.mxu0 0.0
      %520 = vmatpush1.msra.mxu0 0.0
      %521 = vmatprep.subr.mxu0 0.0
      %522 = vmatpush1.msra.mxu0 0.0
      %523 = vmatprep.subr.mxu0 0.0
      %524 = vmatpush1.msra.mxu0 0.0
      %525 = vmatprep.subr.mxu0 0.0
      %526 = vmatpush1.msra.mxu0 0.0
      %527 = vmatprep.subr.mxu0 0.0
      %528 = vmatpush1.msra.mxu0 0.0
      %529 = vmatprep.subr.mxu0 0.0
      %530 = vmatpush1.msra.mxu0 0.0
      %531 = vmatprep.subr.mxu0 0.0
      %532 = vmatpush1.msra.mxu0 0.0
      %533 = vmatprep.subr.mxu0 0.0
      %534 = vmatpush1.msra.mxu0 0.0
      %535 = vmatprep.subr.mxu0 0.0
      %536 = vmatpush1.msra.mxu0 0.0
      %537 = vmatprep.subr.mxu0 0.0
      %538 = vmatpush1.msra.mxu0 0.0
      %539 = vmatprep.subr.mxu0 0.0
      %540 = vmatpush1.msra.mxu0 0.0
      %541 = vmatprep.subr.mxu0 0.0
      %542 = vmatpush1.msra.mxu0 0.0
      %543 = vmatprep.subr.mxu0 0.0
      %544 = vmatpush1.msra.mxu0 0.0
      %545 = vmatprep.subr.mxu0 0.0
      %546 = vmatpush1.msra.mxu0 0.0
      %547 = vmatprep.subr.mxu0 0.0
      %548 = vmatpush1.msra.mxu0 0.0
      %549 = vmatprep.subr.mxu0 0.0
      %550 = vmatpush1.msra.mxu0 0.0
      %551 = vmatprep.subr.mxu0 0.0
      %552 = vmatpush1.msra.mxu0 0.0
      %553 = vmatprep.subr.mxu0 0.0
      %554 = vmatpush1.msra.mxu0 0.0
      %555 = vmatprep.subr.mxu0 0.0
      %556 = vmatpush1.msra.mxu0 0.0
      %557 = vmatprep.subr.mxu0 0.0
      %558 = vmatpush1.msra.mxu0 0.0
      %559 = vmatprep.subr.mxu0 0.0
      %560 = vmatpush1.msra.mxu0 0.0
      %561 = vmatprep.subr.mxu0 0.0
      %562 = vmatpush1.msra.mxu0 0.0
      %563 = vmatprep.mubr.f32.mxu0 0.0
      %564 = vmatmul.mubr.f32.gmra.mrb[0].mxu0 %v470
      %v565 = vpop.f32.mrb[0].mxu0
      %v566 = vadd.f32 %v461, %v565
      %v567 = vpop.f32.mrb[0].mxu0
      %v568 = vadd.f32 %v465, %v567
      %569 = vmatprep.mubr.f32.mxu0 0.0
      %570 = vmatmul.mubr.f32.gmra.mrb[0].mxu0 %v473
      %v571 = vpop.f32.mrb[0].mxu0
      %v572 = vadd.f32 %v461, %v571
      %v573 = vpop.f32.mrb[0].mxu0
      %v574 = vadd.f32 %v465, %v573
      %575 = vmatprep.mubr.f32.mxu0 0.0
      %576 = vmatmul.mubr.f32.gmra.mrb[0].mxu0 %v476
      %v577 = vpop.f32.mrb[0].mxu0
      %v578 = vadd.f32 %v461, %v577
      %v579 = vpop.f32.mrb[0].mxu0
      %v580 = vadd.f32 %v465, %v579
      %581 = vmatprep.mubr.f32.mxu0 0.0
      %582 = vmatmul.mubr.f32.gmra.mrb[0].mxu0 %v479
      %v583 = vpop.f32.mrb[0].mxu0
      %v584 = vadd.f32 %v461, %v583
      %v585 = vpop.f32.mrb[0].mxu0
      %v586 = vadd.f32 %v465, %v585
      %587 = vmatprep.mubr.f32.mxu0 0.0
      %588 = vmatmul.mubr.f32.gmra.mrb[0].mxu0 %v482
      %v589 = vpop.f32.mrb[0].mxu0
      %v590 = vadd.f32 %v461, %v589
      %v591 = vpop.f32.mrb[0].mxu0
      %v592 = vadd.f32 %v465, %v591
      %593 = vmatprep.mubr.f32.mxu0 0.0
      %594 = vmatmul.mubr.f32.gmra.mrb[0].mxu0 %v485
      %v595 = vpop.f32.mrb[0].mxu0
      %v596 = vadd.f32 %v461, %v595
      %v597 = vpop.f32.mrb[0].mxu0
      %v598 = vadd.f32 %v465, %v597
      %599 = vmatprep.mubr.f32.mxu0 0.0
      %600 = vmatmul.mubr.f32.gmra.mrb[0].mxu0 %v488
      %v601 = vpop.f32.mrb[0].mxu0
      %v602 = vadd.f32 %v461, %v601
      %v603 = vpop.f32.mrb[0].mxu0
      %v604 = vadd.f32 %v465, %v603
      %605 = vmatprep.mubr.f32.mxu0 0.0
      %606 = vmatmul.mubr.f32.gmra.mrb[0].mxu0 %v491
      %v607 = vpop.f32.mrb[0].mxu0
      %v608 = vadd.f32 %v461, %v607
      %v609 = vpop.f32.mrb[0].mxu0
      %v610 = vadd.f32 %v465, %v609
      %611 = vmatprep.mubr.f32.mxu0 0.0
      %612 = vmatmul.mubr.f32.gmra.mrb[0].mxu0 %v494
      %v613 = vpop.f32.mrb[0].mxu0
      %v614 = vadd.f32 %v461, %v613
      %v615 = vpop.f32.mrb[0].mxu0
      %v616 = vadd.f32 %v465, %v615
      %617 = vmatprep.mubr.f32.mxu0 0.0
      %618 = vmatmul.mubr.f32.gmra.mrb[0].mxu0 %v497
      %v619 = vpop.f32.mrb[0].mxu0
      %v620 = vadd.f32 %v461, %v619
      %v621 = vpop.f32.mrb[0].mxu0
      %v622 = vadd.f32 %v465, %v621
      %623 = vdwg.mxu0
      %625 = vset.pattern.permute.xlu0 0
      %626 = vperm.xlu0 %625, %v407
      %v627 = vpop.permute.xlu0 %626
      %630 = vset.pattern.permute.xlu0 0
      %631 = vperm.xlu0 %630, %v408
      %v632 = vpop.permute.xlu0 %631
      %635 = vset.pattern.permute.xlu0 0
      %636 = vperm.xlu0 %635, %v409
      %v637 = vpop.permute.xlu0 %636
      %640 = vset.pattern.permute.xlu0 0
      %641 = vperm.xlu0 %640, %v410
      %v642 = vpop.permute.xlu0 %641
      %645 = vset.pattern.permute.xlu0 0
      %646 = vperm.xlu0 %645, %v411
      %v647 = vpop.permute.xlu0 %646
      %650 = vset.pattern.permute.xlu0 0
      %651 = vperm.xlu0 %650, %v412
      %v652 = vpop.permute.xlu0 %651
      %655 = vset.pattern.permute.xlu0 0
      %656 = vperm.xlu0 %655, %v413
      %v657 = vpop.permute.xlu0 %656
      %660 = vset.pattern.permute.xlu0 0
      %661 = vperm.xlu0 %660, %v414
      %v662 = vpop.permute.xlu0 %661
      %665 = vset.pattern.permute.xlu0 0
      %666 = vperm.xlu0 %665, %v415
      %v667 = vpop.permute.xlu0 %666
      %670 = vset.pattern.permute.xlu0 0
      %671 = vperm.xlu0 %670, %v416
      %v672 = vpop.permute.xlu0 %671
      %v674 = vlaneseq
      %v675 = vshrl.u32 %v674, 7
      %v676 = vsub.s32 0, %v675
      %v677 = vrot.slane %v566, %v676
      %v678 = vlaneseq
      %v679 = vshrl.u32 %v678, 7
      %v680 = vsub.s32 0, %v679
      %v681 = vrot.slane %v572, %v680
      %v682 = vlaneseq
      %v683 = vshrl.u32 %v682, 7
      %v684 = vsub.s32 0, %v683
      %v685 = vrot.slane %v578, %v684
      %v686 = vlaneseq
      %v687 = vshrl.u32 %v686, 7
      %v688 = vsub.s32 0, %v687
      %v689 = vrot.slane %v584, %v688
      %v690 = vlaneseq
      %v691 = vshrl.u32 %v690, 7
      %v692 = vsub.s32 0, %v691
      %v693 = vrot.slane %v590, %v692
      %v694 = vlaneseq
      %v695 = vshrl.u32 %v694, 7
      %v696 = vsub.s32 0, %v695
      %v697 = vrot.slane %v596, %v696
      %v698 = vlaneseq
      %v699 = vshrl.u32 %v698, 7
      %v700 = vsub.s32 0, %v699
      %v701 = vrot.slane %v602, %v700
      %v702 = vlaneseq
      %v703 = vshrl.u32 %v702, 7
      %v704 = vsub.s32 0, %v703
      %v705 = vrot.slane %v608, %v704
      %v706 = vlaneseq
      %v707 = vshrl.u32 %v706, 7
      %v708 = vsub.s32 0, %v707
      %v709 = vrot.slane %v614, %v708
      %v710 = vlaneseq
      %v711 = vshrl.u32 %v710, 7
      %v712 = vsub.s32 0, %v711
      %v713 = vrot.slane %v620, %v712
      %v714 = vmul.f32 %v627, %v677
      %v715 = vmul.f32 %v632, %v681
      %v716 = vmul.f32 %v637, %v685
      %v717 = vmul.f32 %v642, %v689
      %v718 = vmul.f32 %v647, %v693
      %v719 = vmul.f32 %v652, %v697
      %v720 = vmul.f32 %v657, %v701
      %v721 = vmul.f32 %v662, %v705
      %v722 = vmul.f32 %v667, %v709
      %v723 = vmul.f32 %v672, %v713
      %v724 = vadd.f32 %v714, 0.0
      %v725 = vadd.f32 %v715, 0.0
      %v726 = vadd.f32 %v716, 0.0
      %v727 = vadd.f32 %v717, 0.0
      %v728 = vadd.f32 %v718, 0.0
      %v729 = vadd.f32 %v719, 0.0
      %v730 = vadd.f32 %v720, 0.0
      %v731 = vadd.f32 %v721, 0.0
      %v732 = vadd.f32 %v722, 0.0
      %v733 = vadd.f32 %v723, 0.0
      %735 = vset.pattern.permute.xlu0 0
      %736 = vperm.xlu0 %735, %v417
      %v737 = vpop.permute.xlu0 %736
      %740 = vset.pattern.permute.xlu0 0
      %741 = vperm.xlu0 %740, %v418
      %v742 = vpop.permute.xlu0 %741
      %745 = vset.pattern.permute.xlu0 0
      %746 = vperm.xlu0 %745, %v419
      %v747 = vpop.permute.xlu0 %746
      %750 = vset.pattern.permute.xlu0 0
      %751 = vperm.xlu0 %750, %v420
      %v752 = vpop.permute.xlu0 %751
      %755 = vset.pattern.permute.xlu0 0
      %756 = vperm.xlu0 %755, %v421
      %v757 = vpop.permute.xlu0 %756
      %760 = vset.pattern.permute.xlu0 0
      %761 = vperm.xlu0 %760, %v422
      %v762 = vpop.permute.xlu0 %761
      %765 = vset.pattern.permute.xlu0 0
      %766 = vperm.xlu0 %765, %v423
      %v767 = vpop.permute.xlu0 %766
      %770 = vset.pattern.permute.xlu0 0
      %771 = vperm.xlu0 %770, %v424
      %v772 = vpop.permute.xlu0 %771
      %775 = vset.pattern.permute.xlu0 0
      %776 = vperm.xlu0 %775, %v425
      %v777 = vpop.permute.xlu0 %776
      %780 = vset.pattern.permute.xlu0 0
      %781 = vperm.xlu0 %780, %v426
      %v782 = vpop.permute.xlu0 %781
      %v784 = vmul.f32 %v737, %v677
      %v785 = vmul.f32 %v742, %v681
      %v786 = vmul.f32 %v747, %v685
      %v787 = vmul.f32 %v752, %v689
      %v788 = vmul.f32 %v757, %v693
      %v789 = vmul.f32 %v762, %v697
      %v790 = vmul.f32 %v767, %v701
      %v791 = vmul.f32 %v772, %v705
      %v792 = vmul.f32 %v777, %v709
      %v793 = vmul.f32 %v782, %v713
      %v794 = vadd.f32 %v784, 0.0
      %v795 = vadd.f32 %v785, 0.0
      %v796 = vadd.f32 %v786, 0.0
      %v797 = vadd.f32 %v787, 0.0
      %v798 = vadd.f32 %v788, 0.0
      %v799 = vadd.f32 %v789, 0.0
      %v800 = vadd.f32 %v790, 0.0
      %v801 = vadd.f32 %v791, 0.0
      %v802 = vadd.f32 %v792, 0.0
      %v803 = vadd.f32 %v793, 0.0
      %804 = vset.pattern.permute.xlu0 1
      %805 = vperm.xlu0 %804, %v407
      %v806 = vpop.permute.xlu0 %805
      %808 = vset.pattern.permute.xlu0 1
      %809 = vperm.xlu0 %808, %v408
      %v810 = vpop.permute.xlu0 %809
      %812 = vset.pattern.permute.xlu0 1
      %813 = vperm.xlu0 %812, %v409
      %v814 = vpop.permute.xlu0 %813
      %816 = vset.pattern.permute.xlu0 1
      %817 = vperm.xlu0 %816, %v410
      %v818 = vpop.permute.xlu0 %817
      %820 = vset.pattern.permute.xlu0 1
      %821 = vperm.xlu0 %820, %v411
      %v822 = vpop.permute.xlu0 %821
      %824 = vset.pattern.permute.xlu0 1
      %825 = vperm.xlu0 %824, %v412
      %v826 = vpop.permute.xlu0 %825
      %828 = vset.pattern.permute.xlu0 1
      %829 = vperm.xlu0 %828, %v413
      %v830 = vpop.permute.xlu0 %829
      %832 = vset.pattern.permute.xlu0 1
      %833 = vperm.xlu0 %832, %v414
      %v834 = vpop.permute.xlu0 %833
      %836 = vset.pattern.permute.xlu0 1
      %837 = vperm.xlu0 %836, %v415
      %v838 = vpop.permute.xlu0 %837
      %840 = vset.pattern.permute.xlu0 1
      %841 = vperm.xlu0 %840, %v416
      %v842 = vpop.permute.xlu0 %841
      %v844 = vlaneseq
      %v845 = vshrl.u32 %v844, 7
      %v846 = vsub.s32 1, %v845
      %v847 = vrot.slane %v566, %v846
      %v848 = vlaneseq
      %v849 = vshrl.u32 %v848, 7
      %v850 = vsub.s32 1, %v849
      %v851 = vrot.slane %v572, %v850
      %v852 = vlaneseq
      %v853 = vshrl.u32 %v852, 7
      %v854 = vsub.s32 1, %v853
      %v855 = vrot.slane %v578, %v854
      %v856 = vlaneseq
      %v857 = vshrl.u32 %v856, 7
      %v858 = vsub.s32 1, %v857
      %v859 = vrot.slane %v584, %v858
      %v860 = vlaneseq
      %v861 = vshrl.u32 %v860, 7
      %v862 = vsub.s32 1, %v861
      %v863 = vrot.slane %v590, %v862
      %v864 = vlaneseq
      %v865 = vshrl.u32 %v864, 7
      %v866 = vsub.s32 1, %v865
      %v867 = vrot.slane %v596, %v866
      %v868 = vlaneseq
      %v869 = vshrl.u32 %v868, 7
      %v870 = vsub.s32 1, %v869
      %v871 = vrot.slane %v602, %v870
      %v872 = vlaneseq
      %v873 = vshrl.u32 %v872, 7
      %v874 = vsub.s32 1, %v873
      %v875 = vrot.slane %v608, %v874
      %v876 = vlaneseq
      %v877 = vshrl.u32 %v876, 7
      %v878 = vsub.s32 1, %v877
      %v879 = vrot.slane %v614, %v878
      %v880 = vlaneseq
      %v881 = vshrl.u32 %v880, 7
      %v882 = vsub.s32 1, %v881
      %v883 = vrot.slane %v620, %v882
      %v884 = vmul.f32 %v806, %v847
      %v885 = vmul.f32 %v810, %v851
      %v886 = vmul.f32 %v814, %v855
      %v887 = vmul.f32 %v818, %v859
      %v888 = vmul.f32 %v822, %v863
      %v889 = vmul.f32 %v826, %v867
      %v890 = vmul.f32 %v830, %v871
      %v891 = vmul.f32 %v834, %v875
      %v892 = vmul.f32 %v838, %v879
      %v893 = vmul.f32 %v842, %v883
      %v894 = vadd.f32 %v724, %v884
      %v895 = vadd.f32 %v725, %v885
      %v896 = vadd.f32 %v726, %v886
      %v897 = vadd.f32 %v727, %v887
      %v898 = vadd.f32 %v728, %v888
      %v899 = vadd.f32 %v729, %v889
      %v900 = vadd.f32 %v730, %v890
      %v901 = vadd.f32 %v731, %v891
      %v902 = vadd.f32 %v732, %v892
      %v903 = vadd.f32 %v733, %v893
      %904 = vset.pattern.permute.xlu0 1
      %905 = vperm.xlu0 %904, %v417
      %v906 = vpop.permute.xlu0 %905
      %908 = vset.pattern.permute.xlu0 1
      %909 = vperm.xlu0 %908, %v418
      %v910 = vpop.permute.xlu0 %909
      %912 = vset.pattern.permute.xlu0 1
      %913 = vperm.xlu0 %912, %v419
      %v914 = vpop.permute.xlu0 %913
      %916 = vset.pattern.permute.xlu0 1
      %917 = vperm.xlu0 %916, %v420
      %v918 = vpop.permute.xlu0 %917
      %920 = vset.pattern.permute.xlu0 1
      %921 = vperm.xlu0 %920, %v421
      %v922 = vpop.permute.xlu0 %921
      %924 = vset.pattern.permute.xlu0 1
      %925 = vperm.xlu0 %924, %v422
      %v926 = vpop.permute.xlu0 %925
      %928 = vset.pattern.permute.xlu0 1
      %929 = vperm.xlu0 %928, %v423
      %v930 = vpop.permute.xlu0 %929
      %932 = vset.pattern.permute.xlu0 1
      %933 = vperm.xlu0 %932, %v424
      %v934 = vpop.permute.xlu0 %933
      %936 = vset.pattern.permute.xlu0 1
      %937 = vperm.xlu0 %936, %v425
      %v938 = vpop.permute.xlu0 %937
      %940 = vset.pattern.permute.xlu0 1
      %941 = vperm.xlu0 %940, %v426
      %v942 = vpop.permute.xlu0 %941
      %v944 = vmul.f32 %v906, %v847
      %v945 = vmul.f32 %v910, %v851
      %v946 = vmul.f32 %v914, %v855
      %v947 = vmul.f32 %v918, %v859
      %v948 = vmul.f32 %v922, %v863
      %v949 = vmul.f32 %v926, %v867
      %v950 = vmul.f32 %v930, %v871
      %v951 = vmul.f32 %v934, %v875
      %v952 = vmul.f32 %v938, %v879
      %v953 = vmul.f32 %v942, %v883
      %v954 = vadd.f32 %v794, %v944
      %v955 = vadd.f32 %v795, %v945
      %v956 = vadd.f32 %v796, %v946
      %v957 = vadd.f32 %v797, %v947
      %v958 = vadd.f32 %v798, %v948
      %v959 = vadd.f32 %v799, %v949
      %v960 = vadd.f32 %v800, %v950
      %v961 = vadd.f32 %v801, %v951
      %v962 = vadd.f32 %v802, %v952
      %v963 = vadd.f32 %v803, %v953
      %964 = vset.pattern.permute.xlu0 2
      %965 = vperm.xlu0 %964, %v407
      %v966 = vpop.permute.xlu0 %965
      %968 = vset.pattern.permute.xlu0 2
      %969 = vperm.xlu0 %968, %v408
      %v970 = vpop.permute.xlu0 %969
      %972 = vset.pattern.permute.xlu0 2
      %973 = vperm.xlu0 %972, %v409
      %v974 = vpop.permute.xlu0 %973
      %976 = vset.pattern.permute.xlu0 2
      %977 = vperm.xlu0 %976, %v410
      %v978 = vpop.permute.xlu0 %977
      %980 = vset.pattern.permute.xlu0 2
      %981 = vperm.xlu0 %980, %v411
      %v982 = vpop.permute.xlu0 %981
      %984 = vset.pattern.permute.xlu0 2
      %985 = vperm.xlu0 %984, %v412
      %v986 = vpop.permute.xlu0 %985
      %988 = vset.pattern.permute.xlu0 2
      %989 = vperm.xlu0 %988, %v413
      %v990 = vpop.permute.xlu0 %989
      %992 = vset.pattern.permute.xlu0 2
      %993 = vperm.xlu0 %992, %v414
      %v994 = vpop.permute.xlu0 %993
      %996 = vset.pattern.permute.xlu0 2
      %997 = vperm.xlu0 %996, %v415
      %v998 = vpop.permute.xlu0 %997
      %1000 = vset.pattern.permute.xlu0 2
      %1001 = vperm.xlu0 %1000, %v416
      %v1002 = vpop.permute.xlu0 %1001
      %v1004 = vlaneseq
      %v1005 = vshrl.u32 %v1004, 7
      %v1006 = vsub.s32 2, %v1005
      %v1007 = vrot.slane %v566, %v1006
      %v1008 = vlaneseq
      %v1009 = vshrl.u32 %v1008, 7
      %v1010 = vsub.s32 2, %v1009
      %v1011 = vrot.slane %v572, %v1010
      %v1012 = vlaneseq
      %v1013 = vshrl.u32 %v1012, 7
      %v1014 = vsub.s32 2, %v1013
      %v1015 = vrot.slane %v578, %v1014
      %v1016 = vlaneseq
      %v1017 = vshrl.u32 %v1016, 7
      %v1018 = vsub.s32 2, %v1017
      %v1019 = vrot.slane %v584, %v1018
      %v1020 = vlaneseq
      %v1021 = vshrl.u32 %v1020, 7
      %v1022 = vsub.s32 2, %v1021
      %v1023 = vrot.slane %v590, %v1022
      %v1024 = vlaneseq
      %v1025 = vshrl.u32 %v1024, 7
      %v1026 = vsub.s32 2, %v1025
      %v1027 = vrot.slane %v596, %v1026
      %v1028 = vlaneseq
      %v1029 = vshrl.u32 %v1028, 7
      %v1030 = vsub.s32 2, %v1029
      %v1031 = vrot.slane %v602, %v1030
      %v1032 = vlaneseq
      %v1033 = vshrl.u32 %v1032, 7
      %v1034 = vsub.s32 2, %v1033
      %v1035 = vrot.slane %v608, %v1034
      %v1036 = vlaneseq
      %v1037 = vshrl.u32 %v1036, 7
      %v1038 = vsub.s32 2, %v1037
      %v1039 = vrot.slane %v614, %v1038
      %v1040 = vlaneseq
      %v1041 = vshrl.u32 %v1040, 7
      %v1042 = vsub.s32 2, %v1041
      %v1043 = vrot.slane %v620, %v1042
      %v1044 = vmul.f32 %v966, %v1007
      %v1045 = vmul.f32 %v970, %v1011
      %v1046 = vmul.f32 %v974, %v1015
      %v1047 = vmul.f32 %v978, %v1019
      %v1048 = vmul.f32 %v982, %v1023
      %v1049 = vmul.f32 %v986, %v1027
      %v1050 = vmul.f32 %v990, %v1031
      %v1051 = vmul.f32 %v994, %v1035
      %v1052 = vmul.f32 %v998, %v1039
      %v1053 = vmul.f32 %v1002, %v1043
      %v1054 = vadd.f32 %v894, %v1044
      %v1055 = vadd.f32 %v895, %v1045
      %v1056 = vadd.f32 %v896, %v1046
      %v1057 = vadd.f32 %v897, %v1047
      %v1058 = vadd.f32 %v898, %v1048
      %v1059 = vadd.f32 %v899, %v1049
      %v1060 = vadd.f32 %v900, %v1050
      %v1061 = vadd.f32 %v901, %v1051
      %v1062 = vadd.f32 %v902, %v1052
      %v1063 = vadd.f32 %v903, %v1053
      %1064 = vset.pattern.permute.xlu0 2
      %1065 = vperm.xlu0 %1064, %v417
      %v1066 = vpop.permute.xlu0 %1065
      %1068 = vset.pattern.permute.xlu0 2
      %1069 = vperm.xlu0 %1068, %v418
      %v1070 = vpop.permute.xlu0 %1069
      %1072 = vset.pattern.permute.xlu0 2
      %1073 = vperm.xlu0 %1072, %v419
      %v1074 = vpop.permute.xlu0 %1073
      %1076 = vset.pattern.permute.xlu0 2
      %1077 = vperm.xlu0 %1076, %v420
      %v1078 = vpop.permute.xlu0 %1077
      %1080 = vset.pattern.permute.xlu0 2
      %1081 = vperm.xlu0 %1080, %v421
      %v1082 = vpop.permute.xlu0 %1081
      %1084 = vset.pattern.permute.xlu0 2
      %1085 = vperm.xlu0 %1084, %v422
      %v1086 = vpop.permute.xlu0 %1085
      %1088 = vset.pattern.permute.xlu0 2
      %1089 = vperm.xlu0 %1088, %v423
      %v1090 = vpop.permute.xlu0 %1089
      %1092 = vset.pattern.permute.xlu0 2
      %1093 = vperm.xlu0 %1092, %v424
      %v1094 = vpop.permute.xlu0 %1093
      %1096 = vset.pattern.permute.xlu0 2
      %1097 = vperm.xlu0 %1096, %v425
      %v1098 = vpop.permute.xlu0 %1097
      %1100 = vset.pattern.permute.xlu0 2
      %1101 = vperm.xlu0 %1100, %v426
      %v1102 = vpop.permute.xlu0 %1101
      %v1104 = vmul.f32 %v1066, %v1007
      %v1105 = vmul.f32 %v1070, %v1011
      %v1106 = vmul.f32 %v1074, %v1015
      %v1107 = vmul.f32 %v1078, %v1019
      %v1108 = vmul.f32 %v1082, %v1023
      %v1109 = vmul.f32 %v1086, %v1027
      %v1110 = vmul.f32 %v1090, %v1031
      %v1111 = vmul.f32 %v1094, %v1035
      %v1112 = vmul.f32 %v1098, %v1039
      %v1113 = vmul.f32 %v1102, %v1043
      %v1114 = vadd.f32 %v954, %v1104
      %v1115 = vadd.f32 %v955, %v1105
      %v1116 = vadd.f32 %v956, %v1106
      %v1117 = vadd.f32 %v957, %v1107
      %v1118 = vadd.f32 %v958, %v1108
      %v1119 = vadd.f32 %v959, %v1109
      %v1120 = vadd.f32 %v960, %v1110
      %v1121 = vadd.f32 %v961, %v1111
      %v1122 = vadd.f32 %v962, %v1112
      %v1123 = vadd.f32 %v963, %v1113
      %1124 = vset.pattern.permute.xlu0 3
      %1125 = vperm.xlu0 %1124, %v407
      %v1126 = vpop.permute.xlu0 %1125
      %1128 = vset.pattern.permute.xlu0 3
      %1129 = vperm.xlu0 %1128, %v408
      %v1130 = vpop.permute.xlu0 %1129
      %1132 = vset.pattern.permute.xlu0 3
      %1133 = vperm.xlu0 %1132, %v409
      %v1134 = vpop.permute.xlu0 %1133
      %1136 = vset.pattern.permute.xlu0 3
      %1137 = vperm.xlu0 %1136, %v410
      %v1138 = vpop.permute.xlu0 %1137
      %1140 = vset.pattern.permute.xlu0 3
      %1141 = vperm.xlu0 %1140, %v411
      %v1142 = vpop.permute.xlu0 %1141
      %1144 = vset.pattern.permute.xlu0 3
      %1145 = vperm.xlu0 %1144, %v412
      %v1146 = vpop.permute.xlu0 %1145
      %1148 = vset.pattern.permute.xlu0 3
      %1149 = vperm.xlu0 %1148, %v413
      %v1150 = vpop.permute.xlu0 %1149
      %1152 = vset.pattern.permute.xlu0 3
      %1153 = vperm.xlu0 %1152, %v414
      %v1154 = vpop.permute.xlu0 %1153
      %1156 = vset.pattern.permute.xlu0 3
      %1157 = vperm.xlu0 %1156, %v415
      %v1158 = vpop.permute.xlu0 %1157
      %1160 = vset.pattern.permute.xlu0 3
      %1161 = vperm.xlu0 %1160, %v416
      %v1162 = vpop.permute.xlu0 %1161
      %v1164 = vlaneseq
      %v1165 = vshrl.u32 %v1164, 7
      %v1166 = vsub.s32 3, %v1165
      %v1167 = vrot.slane %v566, %v1166
      %v1168 = vlaneseq
      %v1169 = vshrl.u32 %v1168, 7
      %v1170 = vsub.s32 3, %v1169
      %v1171 = vrot.slane %v572, %v1170
      %v1172 = vlaneseq
      %v1173 = vshrl.u32 %v1172, 7
      %v1174 = vsub.s32 3, %v1173
      %v1175 = vrot.slane %v578, %v1174
      %v1176 = vlaneseq
      %v1177 = vshrl.u32 %v1176, 7
      %v1178 = vsub.s32 3, %v1177
      %v1179 = vrot.slane %v584, %v1178
      %v1180 = vlaneseq
      %v1181 = vshrl.u32 %v1180, 7
      %v1182 = vsub.s32 3, %v1181
      %v1183 = vrot.slane %v590, %v1182
      %v1184 = vlaneseq
      %v1185 = vshrl.u32 %v1184, 7
      %v1186 = vsub.s32 3, %v1185
      %v1187 = vrot.slane %v596, %v1186
      %v1188 = vlaneseq
      %v1189 = vshrl.u32 %v1188, 7
      %v1190 = vsub.s32 3, %v1189
      %v1191 = vrot.slane %v602, %v1190
      %v1192 = vlaneseq
      %v1193 = vshrl.u32 %v1192, 7
      %v1194 = vsub.s32 3, %v1193
      %v1195 = vrot.slane %v608, %v1194
      %v1196 = vlaneseq
      %v1197 = vshrl.u32 %v1196, 7
      %v1198 = vsub.s32 3, %v1197
      %v1199 = vrot.slane %v614, %v1198
      %v1200 = vlaneseq
      %v1201 = vshrl.u32 %v1200, 7
      %v1202 = vsub.s32 3, %v1201
      %v1203 = vrot.slane %v620, %v1202
      %v1204 = vmul.f32 %v1126, %v1167
      %v1205 = vmul.f32 %v1130, %v1171
      %v1206 = vmul.f32 %v1134, %v1175
      %v1207 = vmul.f32 %v1138, %v1179
      %v1208 = vmul.f32 %v1142, %v1183
      %v1209 = vmul.f32 %v1146, %v1187
      %v1210 = vmul.f32 %v1150, %v1191
      %v1211 = vmul.f32 %v1154, %v1195
      %v1212 = vmul.f32 %v1158, %v1199
      %v1213 = vmul.f32 %v1162, %v1203
      %v1214 = vadd.f32 %v1054, %v1204
      %v1215 = vadd.f32 %v1055, %v1205
      %v1216 = vadd.f32 %v1056, %v1206
      %v1217 = vadd.f32 %v1057, %v1207
      %v1218 = vadd.f32 %v1058, %v1208
      %v1219 = vadd.f32 %v1059, %v1209
      %v1220 = vadd.f32 %v1060, %v1210
      %v1221 = vadd.f32 %v1061, %v1211
      %v1222 = vadd.f32 %v1062, %v1212
      %v1223 = vadd.f32 %v1063, %v1213
      %1224 = vset.pattern.permute.xlu0 3
      %1225 = vperm.xlu0 %1224, %v417
      %v1226 = vpop.permute.xlu0 %1225
      %1228 = vset.pattern.permute.xlu0 3
      %1229 = vperm.xlu0 %1228, %v418
      %v1230 = vpop.permute.xlu0 %1229
      %1232 = vset.pattern.permute.xlu0 3
      %1233 = vperm.xlu0 %1232, %v419
      %v1234 = vpop.permute.xlu0 %1233
      %1236 = vset.pattern.permute.xlu0 3
      %1237 = vperm.xlu0 %1236, %v420
      %v1238 = vpop.permute.xlu0 %1237
      %1240 = vset.pattern.permute.xlu0 3
      %1241 = vperm.xlu0 %1240, %v421
      %v1242 = vpop.permute.xlu0 %1241
      %1244 = vset.pattern.permute.xlu0 3
      %1245 = vperm.xlu0 %1244, %v422
      %v1246 = vpop.permute.xlu0 %1245
      %1248 = vset.pattern.permute.xlu0 3
      %1249 = vperm.xlu0 %1248, %v423
      %v1250 = vpop.permute.xlu0 %1249
      %1252 = vset.pattern.permute.xlu0 3
      %1253 = vperm.xlu0 %1252, %v424
      %v1254 = vpop.permute.xlu0 %1253
      %1256 = vset.pattern.permute.xlu0 3
      %1257 = vperm.xlu0 %1256, %v425
      %v1258 = vpop.permute.xlu0 %1257
      %1260 = vset.pattern.permute.xlu0 3
      %1261 = vperm.xlu0 %1260, %v426
      %v1262 = vpop.permute.xlu0 %1261
      %v1264 = vmul.f32 %v1226, %v1167
      %v1265 = vmul.f32 %v1230, %v1171
      %v1266 = vmul.f32 %v1234, %v1175
      %v1267 = vmul.f32 %v1238, %v1179
      %v1268 = vmul.f32 %v1242, %v1183
      %v1269 = vmul.f32 %v1246, %v1187
      %v1270 = vmul.f32 %v1250, %v1191
      %v1271 = vmul.f32 %v1254, %v1195
      %v1272 = vmul.f32 %v1258, %v1199
      %v1273 = vmul.f32 %v1262, %v1203
      %v1274 = vadd.f32 %v1114, %v1264
      %v1275 = vadd.f32 %v1115, %v1265
      %v1276 = vadd.f32 %v1116, %v1266
      %v1277 = vadd.f32 %v1117, %v1267
      %v1278 = vadd.f32 %v1118, %v1268
      %v1279 = vadd.f32 %v1119, %v1269
      %v1280 = vadd.f32 %v1120, %v1270
      %v1281 = vadd.f32 %v1121, %v1271
      %v1282 = vadd.f32 %v1122, %v1272
      %v1283 = vadd.f32 %v1123, %v1273
      %1284 = vset.pattern.permute.xlu0 4
      %1285 = vperm.xlu0 %1284, %v407
      %v1286 = vpop.permute.xlu0 %1285
      %1288 = vset.pattern.permute.xlu0 4
      %1289 = vperm.xlu0 %1288, %v408
      %v1290 = vpop.permute.xlu0 %1289
      %1292 = vset.pattern.permute.xlu0 4
      %1293 = vperm.xlu0 %1292, %v409
      %v1294 = vpop.permute.xlu0 %1293
      %1296 = vset.pattern.permute.xlu0 4
      %1297 = vperm.xlu0 %1296, %v410
      %v1298 = vpop.permute.xlu0 %1297
      %1300 = vset.pattern.permute.xlu0 4
      %1301 = vperm.xlu0 %1300, %v411
      %v1302 = vpop.permute.xlu0 %1301
      %1304 = vset.pattern.permute.xlu0 4
      %1305 = vperm.xlu0 %1304, %v412
      %v1306 = vpop.permute.xlu0 %1305
      %1308 = vset.pattern.permute.xlu0 4
      %1309 = vperm.xlu0 %1308, %v413
      %v1310 = vpop.permute.xlu0 %1309
      %1312 = vset.pattern.permute.xlu0 4
      %1313 = vperm.xlu0 %1312, %v414
      %v1314 = vpop.permute.xlu0 %1313
      %1316 = vset.pattern.permute.xlu0 4
      %1317 = vperm.xlu0 %1316, %v415
      %v1318 = vpop.permute.xlu0 %1317
      %1320 = vset.pattern.permute.xlu0 4
      %1321 = vperm.xlu0 %1320, %v416
      %v1322 = vpop.permute.xlu0 %1321
      %v1324 = vlaneseq
      %v1325 = vshrl.u32 %v1324, 7
      %v1326 = vsub.s32 4, %v1325
      %v1327 = vrot.slane %v566, %v1326
      %v1328 = vlaneseq
      %v1329 = vshrl.u32 %v1328, 7
      %v1330 = vsub.s32 4, %v1329
      %v1331 = vrot.slane %v572, %v1330
      %v1332 = vlaneseq
      %v1333 = vshrl.u32 %v1332, 7
      %v1334 = vsub.s32 4, %v1333
      %v1335 = vrot.slane %v578, %v1334
      %v1336 = vlaneseq
      %v1337 = vshrl.u32 %v1336, 7
      %v1338 = vsub.s32 4, %v1337
      %v1339 = vrot.slane %v584, %v1338
      %v1340 = vlaneseq
      %v1341 = vshrl.u32 %v1340, 7
      %v1342 = vsub.s32 4, %v1341
      %v1343 = vrot.slane %v590, %v1342
      %v1344 = vlaneseq
      %v1345 = vshrl.u32 %v1344, 7
      %v1346 = vsub.s32 4, %v1345
      %v1347 = vrot.slane %v596, %v1346
      %v1348 = vlaneseq
      %v1349 = vshrl.u32 %v1348, 7
      %v1350 = vsub.s32 4, %v1349
      %v1351 = vrot.slane %v602, %v1350
      %v1352 = vlaneseq
      %v1353 = vshrl.u32 %v1352, 7
      %v1354 = vsub.s32 4, %v1353
      %v1355 = vrot.slane %v608, %v1354
      %v1356 = vlaneseq
      %v1357 = vshrl.u32 %v1356, 7
      %v1358 = vsub.s32 4, %v1357
      %v1359 = vrot.slane %v614, %v1358
      %v1360 = vlaneseq
      %v1361 = vshrl.u32 %v1360, 7
      %v1362 = vsub.s32 4, %v1361
      %v1363 = vrot.slane %v620, %v1362
      %v1364 = vmul.f32 %v1286, %v1327
      %v1365 = vmul.f32 %v1290, %v1331
      %v1366 = vmul.f32 %v1294, %v1335
      %v1367 = vmul.f32 %v1298, %v1339
      %v1368 = vmul.f32 %v1302, %v1343
      %v1369 = vmul.f32 %v1306, %v1347
      %v1370 = vmul.f32 %v1310, %v1351
      %v1371 = vmul.f32 %v1314, %v1355
      %v1372 = vmul.f32 %v1318, %v1359
      %v1373 = vmul.f32 %v1322, %v1363
      %v1374 = vadd.f32 %v1214, %v1364
      %v1375 = vadd.f32 %v1215, %v1365
      %v1376 = vadd.f32 %v1216, %v1366
      %v1377 = vadd.f32 %v1217, %v1367
      %v1378 = vadd.f32 %v1218, %v1368
      %v1379 = vadd.f32 %v1219, %v1369
      %v1380 = vadd.f32 %v1220, %v1370
      %v1381 = vadd.f32 %v1221, %v1371
      %v1382 = vadd.f32 %v1222, %v1372
      %v1383 = vadd.f32 %v1223, %v1373
      %1384 = vset.pattern.permute.xlu0 4
      %1385 = vperm.xlu0 %1384, %v417
      %v1386 = vpop.permute.xlu0 %1385
      %1388 = vset.pattern.permute.xlu0 4
      %1389 = vperm.xlu0 %1388, %v418
      %v1390 = vpop.permute.xlu0 %1389
      %1392 = vset.pattern.permute.xlu0 4
      %1393 = vperm.xlu0 %1392, %v419
      %v1394 = vpop.permute.xlu0 %1393
      %1396 = vset.pattern.permute.xlu0 4
      %1397 = vperm.xlu0 %1396, %v420
      %v1398 = vpop.permute.xlu0 %1397
      %1400 = vset.pattern.permute.xlu0 4
      %1401 = vperm.xlu0 %1400, %v421
      %v1402 = vpop.permute.xlu0 %1401
      %1404 = vset.pattern.permute.xlu0 4
      %1405 = vperm.xlu0 %1404, %v422
      %v1406 = vpop.permute.xlu0 %1405
      %1408 = vset.pattern.permute.xlu0 4
      %1409 = vperm.xlu0 %1408, %v423
      %v1410 = vpop.permute.xlu0 %1409
      %1412 = vset.pattern.permute.xlu0 4
      %1413 = vperm.xlu0 %1412, %v424
      %v1414 = vpop.permute.xlu0 %1413
      %1416 = vset.pattern.permute.xlu0 4
      %1417 = vperm.xlu0 %1416, %v425
      %v1418 = vpop.permute.xlu0 %1417
      %1420 = vset.pattern.permute.xlu0 4
      %1421 = vperm.xlu0 %1420, %v426
      %v1422 = vpop.permute.xlu0 %1421
      %v1424 = vmul.f32 %v1386, %v1327
      %v1425 = vmul.f32 %v1390, %v1331
      %v1426 = vmul.f32 %v1394, %v1335
      %v1427 = vmul.f32 %v1398, %v1339
      %v1428 = vmul.f32 %v1402, %v1343
      %v1429 = vmul.f32 %v1406, %v1347
      %v1430 = vmul.f32 %v1410, %v1351
      %v1431 = vmul.f32 %v1414, %v1355
      %v1432 = vmul.f32 %v1418, %v1359
      %v1433 = vmul.f32 %v1422, %v1363
      %v1434 = vadd.f32 %v1274, %v1424
      %v1435 = vadd.f32 %v1275, %v1425
      %v1436 = vadd.f32 %v1276, %v1426
      %v1437 = vadd.f32 %v1277, %v1427
      %v1438 = vadd.f32 %v1278, %v1428
      %v1439 = vadd.f32 %v1279, %v1429
      %v1440 = vadd.f32 %v1280, %v1430
      %v1441 = vadd.f32 %v1281, %v1431
      %v1442 = vadd.f32 %v1282, %v1432
      %v1443 = vadd.f32 %v1283, %v1433
      %1444 = vset.pattern.permute.xlu0 5
      %1445 = vperm.xlu0 %1444, %v407
      %v1446 = vpop.permute.xlu0 %1445
      %1448 = vset.pattern.permute.xlu0 5
      %1449 = vperm.xlu0 %1448, %v408
      %v1450 = vpop.permute.xlu0 %1449
      %1452 = vset.pattern.permute.xlu0 5
      %1453 = vperm.xlu0 %1452, %v409
      %v1454 = vpop.permute.xlu0 %1453
      %1456 = vset.pattern.permute.xlu0 5
      %1457 = vperm.xlu0 %1456, %v410
      %v1458 = vpop.permute.xlu0 %1457
      %1460 = vset.pattern.permute.xlu0 5
      %1461 = vperm.xlu0 %1460, %v411
      %v1462 = vpop.permute.xlu0 %1461
      %1464 = vset.pattern.permute.xlu0 5
      %1465 = vperm.xlu0 %1464, %v412
      %v1466 = vpop.permute.xlu0 %1465
      %1468 = vset.pattern.permute.xlu0 5
      %1469 = vperm.xlu0 %1468, %v413
      %v1470 = vpop.permute.xlu0 %1469
      %1472 = vset.pattern.permute.xlu0 5
      %1473 = vperm.xlu0 %1472, %v414
      %v1474 = vpop.permute.xlu0 %1473
      %1476 = vset.pattern.permute.xlu0 5
      %1477 = vperm.xlu0 %1476, %v415
      %v1478 = vpop.permute.xlu0 %1477
      %1480 = vset.pattern.permute.xlu0 5
      %1481 = vperm.xlu0 %1480, %v416
      %v1482 = vpop.permute.xlu0 %1481
      %v1484 = vlaneseq
      %v1485 = vshrl.u32 %v1484, 7
      %v1486 = vsub.s32 5, %v1485
      %v1487 = vrot.slane %v566, %v1486
      %v1488 = vlaneseq
      %v1489 = vshrl.u32 %v1488, 7
      %v1490 = vsub.s32 5, %v1489
      %v1491 = vrot.slane %v572, %v1490
      %v1492 = vlaneseq
      %v1493 = vshrl.u32 %v1492, 7
      %v1494 = vsub.s32 5, %v1493
      %v1495 = vrot.slane %v578, %v1494
      %v1496 = vlaneseq
      %v1497 = vshrl.u32 %v1496, 7
      %v1498 = vsub.s32 5, %v1497
      %v1499 = vrot.slane %v584, %v1498
      %v1500 = vlaneseq
      %v1501 = vshrl.u32 %v1500, 7
      %v1502 = vsub.s32 5, %v1501
      %v1503 = vrot.slane %v590, %v1502
      %v1504 = vlaneseq
      %v1505 = vshrl.u32 %v1504, 7
      %v1506 = vsub.s32 5, %v1505
      %v1507 = vrot.slane %v596, %v1506
      %v1508 = vlaneseq
      %v1509 = vshrl.u32 %v1508, 7
      %v1510 = vsub.s32 5, %v1509
      %v1511 = vrot.slane %v602, %v1510
      %v1512 = vlaneseq
      %v1513 = vshrl.u32 %v1512, 7
      %v1514 = vsub.s32 5, %v1513
      %v1515 = vrot.slane %v608, %v1514
      %v1516 = vlaneseq
      %v1517 = vshrl.u32 %v1516, 7
      %v1518 = vsub.s32 5, %v1517
      %v1519 = vrot.slane %v614, %v1518
      %v1520 = vlaneseq
      %v1521 = vshrl.u32 %v1520, 7
      %v1522 = vsub.s32 5, %v1521
      %v1523 = vrot.slane %v620, %v1522
      %v1524 = vmul.f32 %v1446, %v1487
      %v1525 = vmul.f32 %v1450, %v1491
      %v1526 = vmul.f32 %v1454, %v1495
      %v1527 = vmul.f32 %v1458, %v1499
      %v1528 = vmul.f32 %v1462, %v1503
      %v1529 = vmul.f32 %v1466, %v1507
      %v1530 = vmul.f32 %v1470, %v1511
      %v1531 = vmul.f32 %v1474, %v1515
      %v1532 = vmul.f32 %v1478, %v1519
      %v1533 = vmul.f32 %v1482, %v1523
      %v1534 = vadd.f32 %v1374, %v1524
      %v1535 = vadd.f32 %v1375, %v1525
      %v1536 = vadd.f32 %v1376, %v1526
      %v1537 = vadd.f32 %v1377, %v1527
      %v1538 = vadd.f32 %v1378, %v1528
      %v1539 = vadd.f32 %v1379, %v1529
      %v1540 = vadd.f32 %v1380, %v1530
      %v1541 = vadd.f32 %v1381, %v1531
      %v1542 = vadd.f32 %v1382, %v1532
      %v1543 = vadd.f32 %v1383, %v1533
      %1544 = vset.pattern.permute.xlu0 5
      %1545 = vperm.xlu0 %1544, %v417
      %v1546 = vpop.permute.xlu0 %1545
      %1548 = vset.pattern.permute.xlu0 5
      %1549 = vperm.xlu0 %1548, %v418
      %v1550 = vpop.permute.xlu0 %1549
      %1552 = vset.pattern.permute.xlu0 5
      %1553 = vperm.xlu0 %1552, %v419
      %v1554 = vpop.permute.xlu0 %1553
      %1556 = vset.pattern.permute.xlu0 5
      %1557 = vperm.xlu0 %1556, %v420
      %v1558 = vpop.permute.xlu0 %1557
      %1560 = vset.pattern.permute.xlu0 5
      %1561 = vperm.xlu0 %1560, %v421
      %v1562 = vpop.permute.xlu0 %1561
      %1564 = vset.pattern.permute.xlu0 5
      %1565 = vperm.xlu0 %1564, %v422
      %v1566 = vpop.permute.xlu0 %1565
      %1568 = vset.pattern.permute.xlu0 5
      %1569 = vperm.xlu0 %1568, %v423
      %v1570 = vpop.permute.xlu0 %1569
      %1572 = vset.pattern.permute.xlu0 5
      %1573 = vperm.xlu0 %1572, %v424
      %v1574 = vpop.permute.xlu0 %1573
      %1576 = vset.pattern.permute.xlu0 5
      %1577 = vperm.xlu0 %1576, %v425
      %v1578 = vpop.permute.xlu0 %1577
      %1580 = vset.pattern.permute.xlu0 5
      %1581 = vperm.xlu0 %1580, %v426
      %v1582 = vpop.permute.xlu0 %1581
      %v1584 = vmul.f32 %v1546, %v1487
      %v1585 = vmul.f32 %v1550, %v1491
      %v1586 = vmul.f32 %v1554, %v1495
      %v1587 = vmul.f32 %v1558, %v1499
      %v1588 = vmul.f32 %v1562, %v1503
      %v1589 = vmul.f32 %v1566, %v1507
      %v1590 = vmul.f32 %v1570, %v1511
      %v1591 = vmul.f32 %v1574, %v1515
      %v1592 = vmul.f32 %v1578, %v1519
      %v1593 = vmul.f32 %v1582, %v1523
      %v1594 = vadd.f32 %v1434, %v1584
      %v1595 = vadd.f32 %v1435, %v1585
      %v1596 = vadd.f32 %v1436, %v1586
      %v1597 = vadd.f32 %v1437, %v1587
      %v1598 = vadd.f32 %v1438, %v1588
      %v1599 = vadd.f32 %v1439, %v1589
      %v1600 = vadd.f32 %v1440, %v1590
      %v1601 = vadd.f32 %v1441, %v1591
      %v1602 = vadd.f32 %v1442, %v1592
      %v1603 = vadd.f32 %v1443, %v1593
      %1604 = vset.pattern.permute.xlu0 6
      %1605 = vperm.xlu0 %1604, %v407
      %v1606 = vpop.permute.xlu0 %1605
      %1608 = vset.pattern.permute.xlu0 6
      %1609 = vperm.xlu0 %1608, %v408
      %v1610 = vpop.permute.xlu0 %1609
      %1612 = vset.pattern.permute.xlu0 6
      %1613 = vperm.xlu0 %1612, %v409
      %v1614 = vpop.permute.xlu0 %1613
      %1616 = vset.pattern.permute.xlu0 6
      %1617 = vperm.xlu0 %1616, %v410
      %v1618 = vpop.permute.xlu0 %1617
      %1620 = vset.pattern.permute.xlu0 6
      %1621 = vperm.xlu0 %1620, %v411
      %v1622 = vpop.permute.xlu0 %1621
      %1624 = vset.pattern.permute.xlu0 6
      %1625 = vperm.xlu0 %1624, %v412
      %v1626 = vpop.permute.xlu0 %1625
      %1628 = vset.pattern.permute.xlu0 6
      %1629 = vperm.xlu0 %1628, %v413
      %v1630 = vpop.permute.xlu0 %1629
      %1632 = vset.pattern.permute.xlu0 6
      %1633 = vperm.xlu0 %1632, %v414
      %v1634 = vpop.permute.xlu0 %1633
      %1636 = vset.pattern.permute.xlu0 6
      %1637 = vperm.xlu0 %1636, %v415
      %v1638 = vpop.permute.xlu0 %1637
      %1640 = vset.pattern.permute.xlu0 6
      %1641 = vperm.xlu0 %1640, %v416
      %v1642 = vpop.permute.xlu0 %1641
      %v1644 = vlaneseq
      %v1645 = vshrl.u32 %v1644, 7
      %v1646 = vsub.s32 6, %v1645
      %v1647 = vrot.slane %v566, %v1646
      %v1648 = vlaneseq
      %v1649 = vshrl.u32 %v1648, 7
      %v1650 = vsub.s32 6, %v1649
      %v1651 = vrot.slane %v572, %v1650
      %v1652 = vlaneseq
      %v1653 = vshrl.u32 %v1652, 7
      %v1654 = vsub.s32 6, %v1653
      %v1655 = vrot.slane %v578, %v1654
      %v1656 = vlaneseq
      %v1657 = vshrl.u32 %v1656, 7
      %v1658 = vsub.s32 6, %v1657
      %v1659 = vrot.slane %v584, %v1658
      %v1660 = vlaneseq
      %v1661 = vshrl.u32 %v1660, 7
      %v1662 = vsub.s32 6, %v1661
      %v1663 = vrot.slane %v590, %v1662
      %v1664 = vlaneseq
      %v1665 = vshrl.u32 %v1664, 7
      %v1666 = vsub.s32 6, %v1665
      %v1667 = vrot.slane %v596, %v1666
      %v1668 = vlaneseq
      %v1669 = vshrl.u32 %v1668, 7
      %v1670 = vsub.s32 6, %v1669
      %v1671 = vrot.slane %v602, %v1670
      %v1672 = vlaneseq
      %v1673 = vshrl.u32 %v1672, 7
      %v1674 = vsub.s32 6, %v1673
      %v1675 = vrot.slane %v608, %v1674
      %v1676 = vlaneseq
      %v1677 = vshrl.u32 %v1676, 7
      %v1678 = vsub.s32 6, %v1677
      %v1679 = vrot.slane %v614, %v1678
      %v1680 = vlaneseq
      %v1681 = vshrl.u32 %v1680, 7
      %v1682 = vsub.s32 6, %v1681
      %v1683 = vrot.slane %v620, %v1682
      %v1684 = vmul.f32 %v1606, %v1647
      %v1685 = vmul.f32 %v1610, %v1651
      %v1686 = vmul.f32 %v1614, %v1655
      %v1687 = vmul.f32 %v1618, %v1659
      %v1688 = vmul.f32 %v1622, %v1663
      %v1689 = vmul.f32 %v1626, %v1667
      %v1690 = vmul.f32 %v1630, %v1671
      %v1691 = vmul.f32 %v1634, %v1675
      %v1692 = vmul.f32 %v1638, %v1679
      %v1693 = vmul.f32 %v1642, %v1683
      %v1694 = vadd.f32 %v1534, %v1684
      %v1695 = vadd.f32 %v1535, %v1685
      %v1696 = vadd.f32 %v1536, %v1686
      %v1697 = vadd.f32 %v1537, %v1687
      %v1698 = vadd.f32 %v1538, %v1688
      %v1699 = vadd.f32 %v1539, %v1689
      %v1700 = vadd.f32 %v1540, %v1690
      %v1701 = vadd.f32 %v1541, %v1691
      %v1702 = vadd.f32 %v1542, %v1692
      %v1703 = vadd.f32 %v1543, %v1693
      %1704 = vset.pattern.permute.xlu0 6
      %1705 = vperm.xlu0 %1704, %v417
      %v1706 = vpop.permute.xlu0 %1705
      %1708 = vset.pattern.permute.xlu0 6
      %1709 = vperm.xlu0 %1708, %v418
      %v1710 = vpop.permute.xlu0 %1709
      %1712 = vset.pattern.permute.xlu0 6
      %1713 = vperm.xlu0 %1712, %v419
      %v1714 = vpop.permute.xlu0 %1713
      %1716 = vset.pattern.permute.xlu0 6
      %1717 = vperm.xlu0 %1716, %v420
      %v1718 = vpop.permute.xlu0 %1717
      %1720 = vset.pattern.permute.xlu0 6
      %1721 = vperm.xlu0 %1720, %v421
      %v1722 = vpop.permute.xlu0 %1721
      %1724 = vset.pattern.permute.xlu0 6
      %1725 = vperm.xlu0 %1724, %v422
      %v1726 = vpop.permute.xlu0 %1725
      %1728 = vset.pattern.permute.xlu0 6
      %1729 = vperm.xlu0 %1728, %v423
      %v1730 = vpop.permute.xlu0 %1729
      %1732 = vset.pattern.permute.xlu0 6
      %1733 = vperm.xlu0 %1732, %v424
      %v1734 = vpop.permute.xlu0 %1733
      %1736 = vset.pattern.permute.xlu0 6
      %1737 = vperm.xlu0 %1736, %v425
      %v1738 = vpop.permute.xlu0 %1737
      %1740 = vset.pattern.permute.xlu0 6
      %1741 = vperm.xlu0 %1740, %v426
      %v1742 = vpop.permute.xlu0 %1741
      %v1744 = vmul.f32 %v1706, %v1647
      %v1745 = vmul.f32 %v1710, %v1651
      %v1746 = vmul.f32 %v1714, %v1655
      %v1747 = vmul.f32 %v1718, %v1659
      %v1748 = vmul.f32 %v1722, %v1663
      %v1749 = vmul.f32 %v1726, %v1667
      %v1750 = vmul.f32 %v1730, %v1671
      %v1751 = vmul.f32 %v1734, %v1675
      %v1752 = vmul.f32 %v1738, %v1679
      %v1753 = vmul.f32 %v1742, %v1683
      %v1754 = vadd.f32 %v1594, %v1744
      %v1755 = vadd.f32 %v1595, %v1745
      %v1756 = vadd.f32 %v1596, %v1746
      %v1757 = vadd.f32 %v1597, %v1747
      %v1758 = vadd.f32 %v1598, %v1748
      %v1759 = vadd.f32 %v1599, %v1749
      %v1760 = vadd.f32 %v1600, %v1750
      %v1761 = vadd.f32 %v1601, %v1751
      %v1762 = vadd.f32 %v1602, %v1752
      %v1763 = vadd.f32 %v1603, %v1753
      %1764 = vset.pattern.permute.xlu0 7
      %1765 = vperm.xlu0 %1764, %v407
      %v1766 = vpop.permute.xlu0 %1765
      %1768 = vset.pattern.permute.xlu0 7
      %1769 = vperm.xlu0 %1768, %v408
      %v1770 = vpop.permute.xlu0 %1769
      %1772 = vset.pattern.permute.xlu0 7
      %1773 = vperm.xlu0 %1772, %v409
      %v1774 = vpop.permute.xlu0 %1773
      %1776 = vset.pattern.permute.xlu0 7
      %1777 = vperm.xlu0 %1776, %v410
      %v1778 = vpop.permute.xlu0 %1777
      %1780 = vset.pattern.permute.xlu0 7
      %1781 = vperm.xlu0 %1780, %v411
      %v1782 = vpop.permute.xlu0 %1781
      %1784 = vset.pattern.permute.xlu0 7
      %1785 = vperm.xlu0 %1784, %v412
      %v1786 = vpop.permute.xlu0 %1785
      %1788 = vset.pattern.permute.xlu0 7
      %1789 = vperm.xlu0 %1788, %v413
      %v1790 = vpop.permute.xlu0 %1789
      %1792 = vset.pattern.permute.xlu0 7
      %1793 = vperm.xlu0 %1792, %v414
      %v1794 = vpop.permute.xlu0 %1793
      %1796 = vset.pattern.permute.xlu0 7
      %1797 = vperm.xlu0 %1796, %v415
      %v1798 = vpop.permute.xlu0 %1797
      %1800 = vset.pattern.permute.xlu0 7
      %1801 = vperm.xlu0 %1800, %v416
      %v1802 = vpop.permute.xlu0 %1801
      %v1804 = vlaneseq
      %v1805 = vshrl.u32 %v1804, 7
      %v1806 = vsub.s32 7, %v1805
      %v1807 = vrot.slane %v566, %v1806
      %v1808 = vlaneseq
      %v1809 = vshrl.u32 %v1808, 7
      %v1810 = vsub.s32 7, %v1809
      %v1811 = vrot.slane %v572, %v1810
      %v1812 = vlaneseq
      %v1813 = vshrl.u32 %v1812, 7
      %v1814 = vsub.s32 7, %v1813
      %v1815 = vrot.slane %v578, %v1814
      %v1816 = vlaneseq
      %v1817 = vshrl.u32 %v1816, 7
      %v1818 = vsub.s32 7, %v1817
      %v1819 = vrot.slane %v584, %v1818
      %v1820 = vlaneseq
      %v1821 = vshrl.u32 %v1820, 7
      %v1822 = vsub.s32 7, %v1821
      %v1823 = vrot.slane %v590, %v1822
      %v1824 = vlaneseq
      %v1825 = vshrl.u32 %v1824, 7
      %v1826 = vsub.s32 7, %v1825
      %v1827 = vrot.slane %v596, %v1826
      %v1828 = vlaneseq
      %v1829 = vshrl.u32 %v1828, 7
      %v1830 = vsub.s32 7, %v1829
      %v1831 = vrot.slane %v602, %v1830
      %v1832 = vlaneseq
      %v1833 = vshrl.u32 %v1832, 7
      %v1834 = vsub.s32 7, %v1833
      %v1835 = vrot.slane %v608, %v1834
      %v1836 = vlaneseq
      %v1837 = vshrl.u32 %v1836, 7
      %v1838 = vsub.s32 7, %v1837
      %v1839 = vrot.slane %v614, %v1838
      %v1840 = vlaneseq
      %v1841 = vshrl.u32 %v1840, 7
      %v1842 = vsub.s32 7, %v1841
      %v1843 = vrot.slane %v620, %v1842
      %v1844 = vmul.f32 %v1766, %v1807
      %v1845 = vmul.f32 %v1770, %v1811
      %v1846 = vmul.f32 %v1774, %v1815
      %v1847 = vmul.f32 %v1778, %v1819
      %v1848 = vmul.f32 %v1782, %v1823
      %v1849 = vmul.f32 %v1786, %v1827
      %v1850 = vmul.f32 %v1790, %v1831
      %v1851 = vmul.f32 %v1794, %v1835
      %v1852 = vmul.f32 %v1798, %v1839
      %v1853 = vmul.f32 %v1802, %v1843
      %v1854 = vadd.f32 %v1694, %v1844
      %v1855 = vadd.f32 %v1695, %v1845
      %v1856 = vadd.f32 %v1696, %v1846
      %v1857 = vadd.f32 %v1697, %v1847
      %v1858 = vadd.f32 %v1698, %v1848
      %v1859 = vadd.f32 %v1699, %v1849
      %v1860 = vadd.f32 %v1700, %v1850
      %v1861 = vadd.f32 %v1701, %v1851
      %v1862 = vadd.f32 %v1702, %v1852
      %v1863 = vadd.f32 %v1703, %v1853
      %1864 = vset.pattern.permute.xlu0 7
      %1865 = vperm.xlu0 %1864, %v417
      %v1866 = vpop.permute.xlu0 %1865
      %1868 = vset.pattern.permute.xlu0 7
      %1869 = vperm.xlu0 %1868, %v418
      %v1870 = vpop.permute.xlu0 %1869
      %1872 = vset.pattern.permute.xlu0 7
      %1873 = vperm.xlu0 %1872, %v419
      %v1874 = vpop.permute.xlu0 %1873
      %1876 = vset.pattern.permute.xlu0 7
      %1877 = vperm.xlu0 %1876, %v420
      %v1878 = vpop.permute.xlu0 %1877
      %1880 = vset.pattern.permute.xlu0 7
      %1881 = vperm.xlu0 %1880, %v421
      %v1882 = vpop.permute.xlu0 %1881
      %1884 = vset.pattern.permute.xlu0 7
      %1885 = vperm.xlu0 %1884, %v422
      %v1886 = vpop.permute.xlu0 %1885
      %1888 = vset.pattern.permute.xlu0 7
      %1889 = vperm.xlu0 %1888, %v423
      %v1890 = vpop.permute.xlu0 %1889
      %1892 = vset.pattern.permute.xlu0 7
      %1893 = vperm.xlu0 %1892, %v424
      %v1894 = vpop.permute.xlu0 %1893
      %1896 = vset.pattern.permute.xlu0 7
      %1897 = vperm.xlu0 %1896, %v425
      %v1898 = vpop.permute.xlu0 %1897
      %1900 = vset.pattern.permute.xlu0 7
      %1901 = vperm.xlu0 %1900, %v426
      %v1902 = vpop.permute.xlu0 %1901
      %v1904 = vmul.f32 %v1866, %v1807
      %v1905 = vmul.f32 %v1870, %v1811
      %v1906 = vmul.f32 %v1874, %v1815
      %v1907 = vmul.f32 %v1878, %v1819
      %v1908 = vmul.f32 %v1882, %v1823
      %v1909 = vmul.f32 %v1886, %v1827
      %v1910 = vmul.f32 %v1890, %v1831
      %v1911 = vmul.f32 %v1894, %v1835
      %v1912 = vmul.f32 %v1898, %v1839
      %v1913 = vmul.f32 %v1902, %v1843
      %v1914 = vadd.f32 %v1754, %v1904
      %v1915 = vadd.f32 %v1755, %v1905
      %v1916 = vadd.f32 %v1756, %v1906
      %v1917 = vadd.f32 %v1757, %v1907
      %v1918 = vadd.f32 %v1758, %v1908
      %v1919 = vadd.f32 %v1759, %v1909
      %v1920 = vadd.f32 %v1760, %v1910
      %v1921 = vadd.f32 %v1761, %v1911
      %v1922 = vadd.f32 %v1762, %v1912
      %v1923 = vadd.f32 %v1763, %v1913
      %v1925 = vlaneseq
      %v1926 = vshrl.u32 %v1925, 7
      %v1927 = vsub.s32 0, %v1926
      %v1928 = vrot.slane %v445, %v1927
      %v1930 = vadd.f32 %v1854, %v1928
      %v1931 = vadd.f32 %v1855, %v1928
      %v1932 = vadd.f32 %v1856, %v1928
      %v1933 = vadd.f32 %v1857, %v1928
      %v1934 = vadd.f32 %v1858, %v1928
      %v1935 = vadd.f32 %v1859, %v1928
      %v1936 = vadd.f32 %v1860, %v1928
      %v1937 = vadd.f32 %v1861, %v1928
      %v1938 = vadd.f32 %v1862, %v1928
      %v1939 = vadd.f32 %v1863, %v1928
      %v1941 = vlaneseq
      %v1942 = vshrl.u32 %v1941, 7
      %v1943 = vsub.s32 0, %v1942
      %v1944 = vrot.slane %v446, %v1943
      %1945 = vrot.lane.b32.xlu0 %v1944, 32
      %v1946 = vpop.permute.xlu0 %1945
      %v1948 = vadd.f32 %v1914, %v1946
      %v1949 = vadd.f32 %v1915, %v1946
      %v1950 = vadd.f32 %v1916, %v1946
      %v1951 = vadd.f32 %v1917, %v1946
      %v1952 = vadd.f32 %v1918, %v1946
      %v1953 = vadd.f32 %v1919, %v1946
      %v1954 = vadd.f32 %v1920, %v1946
      %v1955 = vadd.f32 %v1921, %v1946
      %v1956 = vadd.f32 %v1922, %v1946
      %v1957 = vadd.f32 %v1923, %v1946
      %1968 = vrot.lane.b32.xlu0 %v1948, 96
      %v1969 = vpop.permute.xlu0 %1968
      %1970 = vrot.lane.b32.xlu0 %v1949, 96
      %v1971 = vpop.permute.xlu0 %1970
      %1972 = vrot.lane.b32.xlu0 %v1950, 96
      %v1973 = vpop.permute.xlu0 %1972
      %1974 = vrot.lane.b32.xlu0 %v1951, 96
      %v1975 = vpop.permute.xlu0 %1974
      %1976 = vrot.lane.b32.xlu0 %v1952, 96
      %v1977 = vpop.permute.xlu0 %1976
      %1978 = vrot.lane.b32.xlu0 %v1953, 96
      %v1979 = vpop.permute.xlu0 %1978
      %1980 = vrot.lane.b32.xlu0 %v1954, 96
      %v1981 = vpop.permute.xlu0 %1980
      %1982 = vrot.lane.b32.xlu0 %v1955, 96
      %v1983 = vpop.permute.xlu0 %1982
      %1984 = vrot.lane.b32.xlu0 %v1956, 96
      %v1985 = vpop.permute.xlu0 %1984
      %1986 = vrot.lane.b32.xlu0 %v1957, 96
      %v1987 = vpop.permute.xlu0 %1986
      %v1988 = vsel %vm468, %v1969, 0
      %v1990 = vsel %vm468, %v1971, 0
      %v1992 = vsel %vm468, %v1973, 0
      %v1994 = vsel %vm468, %v1975, 0
      %v1996 = vsel %vm468, %v1977, 0
      %v1998 = vsel %vm468, %v1979, 0
      %v2000 = vsel %vm468, %v1981, 0
      %v2002 = vsel %vm468, %v1983, 0
      %v2004 = vsel %vm468, %v1985, 0
      %v2006 = vsel %vm468, %v1987, 0
      %2008 = vmatprep.subr.mxu0 0.0
      %2009 = vmatpush1.msra.mxu0 %v440
      %2010 = vmatprep.subr.mxu0 0.0
      %2011 = vmatpush1.msra.mxu0 %v441
      %2012 = vmatprep.subr.mxu0 0.0
      %2013 = vmatpush1.msra.mxu0 %v442
      %2014 = vmatprep.subr.mxu0 0.0
      %2015 = vmatpush1.msra.mxu0 %v443
      %2016 = vmatprep.subr.mxu0 0.0
      %2017 = vmatpush1.msra.mxu0 0.0
      %2018 = vmatprep.subr.mxu0 0.0
      %2019 = vmatpush1.msra.mxu0 0.0
      %2020 = vmatprep.subr.mxu0 0.0
      %2021 = vmatpush1.msra.mxu0 0.0
      %2022 = vmatprep.subr.mxu0 0.0
      %2023 = vmatpush1.msra.mxu0 0.0
      %2024 = vmatprep.subr.mxu0 0.0
      %2025 = vmatpush1.msra.mxu0 0.0
      %2026 = vmatprep.subr.mxu0 0.0
      %2027 = vmatpush1.msra.mxu0 0.0
      %2028 = vmatprep.subr.mxu0 0.0
      %2029 = vmatpush1.msra.mxu0 0.0
      %2030 = vmatprep.subr.mxu0 0.0
      %2031 = vmatpush1.msra.mxu0 0.0
      %2032 = vmatprep.subr.mxu0 0.0
      %2033 = vmatpush1.msra.mxu0 0.0
      %2034 = vmatprep.subr.mxu0 0.0
      %2035 = vmatpush1.msra.mxu0 0.0
      %2036 = vmatprep.subr.mxu0 0.0
      %2037 = vmatpush1.msra.mxu0 0.0
      %2038 = vmatprep.subr.mxu0 0.0
      %2039 = vmatpush1.msra.mxu0 0.0
      %2040 = vmatprep.subr.mxu0 0.0
      %2041 = vmatpush1.msra.mxu0 0.0
      %2042 = vmatprep.subr.mxu0 0.0
      %2043 = vmatpush1.msra.mxu0 0.0
      %2044 = vmatprep.subr.mxu0 0.0
      %2045 = vmatpush1.msra.mxu0 0.0
      %2046 = vmatprep.subr.mxu0 0.0
      %2047 = vmatpush1.msra.mxu0 0.0
      %2048 = vmatprep.subr.mxu0 0.0
      %2049 = vmatpush1.msra.mxu0 0.0
      %2050 = vmatprep.subr.mxu0 0.0
      %2051 = vmatpush1.msra.mxu0 0.0
      %2052 = vmatprep.subr.mxu0 0.0
      %2053 = vmatpush1.msra.mxu0 0.0
      %2054 = vmatprep.subr.mxu0 0.0
      %2055 = vmatpush1.msra.mxu0 0.0
      %2056 = vmatprep.subr.mxu0 0.0
      %2057 = vmatpush1.msra.mxu0 0.0
      %2058 = vmatprep.subr.mxu0 0.0
      %2059 = vmatpush1.msra.mxu0 0.0
      %2060 = vmatprep.subr.mxu0 0.0
      %2061 = vmatpush1.msra.mxu0 0.0
      %2062 = vmatprep.subr.mxu0 0.0
      %2063 = vmatpush1.msra.mxu0 0.0
      %2064 = vmatprep.subr.mxu0 0.0
      %2065 = vmatpush1.msra.mxu0 0.0
      %2066 = vmatprep.subr.mxu0 0.0
      %2067 = vmatpush1.msra.mxu0 0.0
      %2068 = vmatprep.subr.mxu0 0.0
      %2069 = vmatpush1.msra.mxu0 0.0
      %2070 = vmatprep.subr.mxu0 0.0
      %2071 = vmatpush1.msra.mxu0 0.0
      %2072 = vmatprep.mubr.f32.mxu0 0.0
      %2073 = vmatmul.mubr.f32.gmra.mrb[0].mxu0 %v1988
      %v2074 = vpop.f32.mrb[0].mxu0
      %v2075 = vadd.f32 0.0, %v2074
      %v2076 = vpop.f32.mrb[0].mxu0
      %2077 = vmatprep.mubr.f32.mxu0 0.0
      %2078 = vmatmul.mubr.f32.gmra.mrb[0].mxu0 %v1990
      %v2079 = vpop.f32.mrb[0].mxu0
      %v2080 = vadd.f32 0.0, %v2079
      %v2081 = vpop.f32.mrb[0].mxu0
      %2082 = vmatprep.mubr.f32.mxu0 0.0
      %2083 = vmatmul.mubr.f32.gmra.mrb[0].mxu0 %v1992
      %v2084 = vpop.f32.mrb[0].mxu0
      %v2085 = vadd.f32 0.0, %v2084
      %v2086 = vpop.f32.mrb[0].mxu0
      %2087 = vmatprep.mubr.f32.mxu0 0.0
      %2088 = vmatmul.mubr.f32.gmra.mrb[0].mxu0 %v1994
      %v2089 = vpop.f32.mrb[0].mxu0
      %v2090 = vadd.f32 0.0, %v2089
      %v2091 = vpop.f32.mrb[0].mxu0
      %2092 = vmatprep.mubr.f32.mxu0 0.0
      %2093 = vmatmul.mubr.f32.gmra.mrb[0].mxu0 %v1996
      %v2094 = vpop.f32.mrb[0].mxu0
      %v2095 = vadd.f32 0.0, %v2094
      %v2096 = vpop.f32.mrb[0].mxu0
      %2097 = vmatprep.mubr.f32.mxu0 0.0
      %2098 = vmatmul.mubr.f32.gmra.mrb[0].mxu0 %v1998
      %v2099 = vpop.f32.mrb[0].mxu0
      %v2100 = vadd.f32 0.0, %v2099
      %v2101 = vpop.f32.mrb[0].mxu0
      %2102 = vmatprep.mubr.f32.mxu0 0.0
      %2103 = vmatmul.mubr.f32.gmra.mrb[0].mxu0 %v2000
      %v2104 = vpop.f32.mrb[0].mxu0
      %v2105 = vadd.f32 0.0, %v2104
      %v2106 = vpop.f32.mrb[0].mxu0
      %2107 = vmatprep.mubr.f32.mxu0 0.0
      %2108 = vmatmul.mubr.f32.gmra.mrb[0].mxu0 %v2002
      %v2109 = vpop.f32.mrb[0].mxu0
      %v2110 = vadd.f32 0.0, %v2109
      %v2111 = vpop.f32.mrb[0].mxu0
      %2112 = vmatprep.mubr.f32.mxu0 0.0
      %2113 = vmatmul.mubr.f32.gmra.mrb[0].mxu0 %v2004
      %v2114 = vpop.f32.mrb[0].mxu0
      %v2115 = vadd.f32 0.0, %v2114
      %v2116 = vpop.f32.mrb[0].mxu0
      %2117 = vmatprep.mubr.f32.mxu0 0.0
      %2118 = vmatmul.mubr.f32.gmra.mrb[0].mxu0 %v2006
      %v2119 = vpop.f32.mrb[0].mxu0
      %v2120 = vadd.f32 0.0, %v2119
      %v2121 = vpop.f32.mrb[0].mxu0
      %2122 = vdwg.mxu0
      %v2124 = vsel %vm468, %v1930, 0
      %v2127 = vsel %vm468, %v1931, 0
      %v2130 = vsel %vm468, %v1932, 0
      %v2133 = vsel %vm468, %v1933, 0
      %v2136 = vsel %vm468, %v1934, 0
      %v2139 = vsel %vm468, %v1935, 0
      %v2142 = vsel %vm468, %v1936, 0
      %v2145 = vsel %vm468, %v1937, 0
      %v2148 = vsel %vm468, %v1938, 0
      %v2151 = vsel %vm468, %v1939, 0
      %2153 = vmatprep.subr.mxu0 0.0
      %2154 = vmatpush1.msra.mxu0 %v436
      %2155 = vmatprep.subr.mxu0 0.0
      %2156 = vmatpush1.msra.mxu0 %v437
      %2157 = vmatprep.subr.mxu0 0.0
      %2158 = vmatpush1.msra.mxu0 %v438
      %2159 = vmatprep.subr.mxu0 0.0
      %2160 = vmatpush1.msra.mxu0 %v439
      %2161 = vmatprep.subr.mxu0 0.0
      %2162 = vmatpush1.msra.mxu0 0.0
      %2163 = vmatprep.subr.mxu0 0.0
      %2164 = vmatpush1.msra.mxu0 0.0
      %2165 = vmatprep.subr.mxu0 0.0
      %2166 = vmatpush1.msra.mxu0 0.0
      %2167 = vmatprep.subr.mxu0 0.0
      %2168 = vmatpush1.msra.mxu0 0.0
      %2169 = vmatprep.subr.mxu0 0.0
      %2170 = vmatpush1.msra.mxu0 0.0
      %2171 = vmatprep.subr.mxu0 0.0
      %2172 = vmatpush1.msra.mxu0 0.0
      %2173 = vmatprep.subr.mxu0 0.0
      %2174 = vmatpush1.msra.mxu0 0.0
      %2175 = vmatprep.subr.mxu0 0.0
      %2176 = vmatpush1.msra.mxu0 0.0
      %2177 = vmatprep.subr.mxu0 0.0
      %2178 = vmatpush1.msra.mxu0 0.0
      %2179 = vmatprep.subr.mxu0 0.0
      %2180 = vmatpush1.msra.mxu0 0.0
      %2181 = vmatprep.subr.mxu0 0.0
      %2182 = vmatpush1.msra.mxu0 0.0
      %2183 = vmatprep.subr.mxu0 0.0
      %2184 = vmatpush1.msra.mxu0 0.0
      %2185 = vmatprep.subr.mxu0 0.0
      %2186 = vmatpush1.msra.mxu0 0.0
      %2187 = vmatprep.subr.mxu0 0.0
      %2188 = vmatpush1.msra.mxu0 0.0
      %2189 = vmatprep.subr.mxu0 0.0
      %2190 = vmatpush1.msra.mxu0 0.0
      %2191 = vmatprep.subr.mxu0 0.0
      %2192 = vmatpush1.msra.mxu0 0.0
      %2193 = vmatprep.subr.mxu0 0.0
      %2194 = vmatpush1.msra.mxu0 0.0
      %2195 = vmatprep.subr.mxu0 0.0
      %2196 = vmatpush1.msra.mxu0 0.0
      %2197 = vmatprep.subr.mxu0 0.0
      %2198 = vmatpush1.msra.mxu0 0.0
      %2199 = vmatprep.subr.mxu0 0.0
      %2200 = vmatpush1.msra.mxu0 0.0
      %2201 = vmatprep.subr.mxu0 0.0
      %2202 = vmatpush1.msra.mxu0 0.0
      %2203 = vmatprep.subr.mxu0 0.0
      %2204 = vmatpush1.msra.mxu0 0.0
      %2205 = vmatprep.subr.mxu0 0.0
      %2206 = vmatpush1.msra.mxu0 0.0
      %2207 = vmatprep.subr.mxu0 0.0
      %2208 = vmatpush1.msra.mxu0 0.0
      %2209 = vmatprep.subr.mxu0 0.0
      %2210 = vmatpush1.msra.mxu0 0.0
      %2211 = vmatprep.subr.mxu0 0.0
      %2212 = vmatpush1.msra.mxu0 0.0
      %2213 = vmatprep.subr.mxu0 0.0
      %2214 = vmatpush1.msra.mxu0 0.0
      %2215 = vmatprep.subr.mxu0 0.0
      %2216 = vmatpush1.msra.mxu0 0.0
      %2217 = vmatprep.mubr.f32.mxu0 0.0
      %2218 = vmatmul.mubr.f32.gmra.mrb[0].mxu0 %v2124
      %v2219 = vpop.f32.mrb[0].mxu0
      %v2220 = vadd.f32 %v2075, %v2219
      %v2221 = vpop.f32.mrb[0].mxu0
      %2222 = vmatprep.mubr.f32.mxu0 0.0
      %2223 = vmatmul.mubr.f32.gmra.mrb[0].mxu0 %v2127
      %v2224 = vpop.f32.mrb[0].mxu0
      %v2225 = vadd.f32 %v2080, %v2224
      %v2226 = vpop.f32.mrb[0].mxu0
      %2227 = vmatprep.mubr.f32.mxu0 0.0
      %2228 = vmatmul.mubr.f32.gmra.mrb[0].mxu0 %v2130
      %v2229 = vpop.f32.mrb[0].mxu0
      %v2230 = vadd.f32 %v2085, %v2229
      %v2231 = vpop.f32.mrb[0].mxu0
      %2232 = vmatprep.mubr.f32.mxu0 0.0
      %2233 = vmatmul.mubr.f32.gmra.mrb[0].mxu0 %v2133
      %v2234 = vpop.f32.mrb[0].mxu0
      %v2235 = vadd.f32 %v2090, %v2234
      %v2236 = vpop.f32.mrb[0].mxu0
      %2237 = vmatprep.mubr.f32.mxu0 0.0
      %2238 = vmatmul.mubr.f32.gmra.mrb[0].mxu0 %v2136
      %v2239 = vpop.f32.mrb[0].mxu0
      %v2240 = vadd.f32 %v2095, %v2239
      %v2241 = vpop.f32.mrb[0].mxu0
      %2242 = vmatprep.mubr.f32.mxu0 0.0
      %2243 = vmatmul.mubr.f32.gmra.mrb[0].mxu0 %v2139
      %v2244 = vpop.f32.mrb[0].mxu0
      %v2245 = vadd.f32 %v2100, %v2244
      %v2246 = vpop.f32.mrb[0].mxu0
      %2247 = vmatprep.mubr.f32.mxu0 0.0
      %2248 = vmatmul.mubr.f32.gmra.mrb[0].mxu0 %v2142
      %v2249 = vpop.f32.mrb[0].mxu0
      %v2250 = vadd.f32 %v2105, %v2249
      %v2251 = vpop.f32.mrb[0].mxu0
      %2252 = vmatprep.mubr.f32.mxu0 0.0
      %2253 = vmatmul.mubr.f32.gmra.mrb[0].mxu0 %v2145
      %v2254 = vpop.f32.mrb[0].mxu0
      %v2255 = vadd.f32 %v2110, %v2254
      %v2256 = vpop.f32.mrb[0].mxu0
      %2257 = vmatprep.mubr.f32.mxu0 0.0
      %2258 = vmatmul.mubr.f32.gmra.mrb[0].mxu0 %v2148
      %v2259 = vpop.f32.mrb[0].mxu0
      %v2260 = vadd.f32 %v2115, %v2259
      %v2261 = vpop.f32.mrb[0].mxu0
      %2262 = vmatprep.mubr.f32.mxu0 0.0
      %2263 = vmatmul.mubr.f32.gmra.mrb[0].mxu0 %v2151
      %v2264 = vpop.f32.mrb[0].mxu0
      %v2265 = vadd.f32 %v2120, %v2264
      %v2266 = vpop.f32.mrb[0].mxu0
      %2267 = vdwg.mxu0
      %v2269 = vlaneseq
      %v2270 = vshrl.u32 %v2269, 7
      %v2271 = vsub.s32 0, %v2270
      %v2272 = vrot.slane %v444, %v2271
      %v2274 = vadd.f32 %v2220, %v2272
      %v2275 = vadd.f32 %v2225, %v2272
      %v2276 = vadd.f32 %v2230, %v2272
      %v2277 = vadd.f32 %v2235, %v2272
      %v2278 = vadd.f32 %v2240, %v2272
      %v2279 = vadd.f32 %v2245, %v2272
      %v2280 = vadd.f32 %v2250, %v2272
      %v2281 = vadd.f32 %v2255, %v2272
      %v2282 = vadd.f32 %v2260, %v2272
      %v2283 = vadd.f32 %v2265, %v2272
      %2294 = vrot.lane.b32.xlu0 %v566, 64
      %v2295 = vpop.permute.xlu0 %2294
      %2296 = vrot.lane.b32.xlu0 %v572, 64
      %v2297 = vpop.permute.xlu0 %2296
      %2298 = vrot.lane.b32.xlu0 %v578, 64
      %v2299 = vpop.permute.xlu0 %2298
      %2300 = vrot.lane.b32.xlu0 %v584, 64
      %v2301 = vpop.permute.xlu0 %2300
      %2302 = vrot.lane.b32.xlu0 %v590, 64
      %v2303 = vpop.permute.xlu0 %2302
      %2304 = vrot.lane.b32.xlu0 %v596, 64
      %v2305 = vpop.permute.xlu0 %2304
      %2306 = vrot.lane.b32.xlu0 %v602, 64
      %v2307 = vpop.permute.xlu0 %2306
      %2308 = vrot.lane.b32.xlu0 %v608, 64
      %v2309 = vpop.permute.xlu0 %2308
      %2310 = vrot.lane.b32.xlu0 %v614, 64
      %v2311 = vpop.permute.xlu0 %2310
      %2312 = vrot.lane.b32.xlu0 %v620, 64
      %v2313 = vpop.permute.xlu0 %2312
      %v2324 = vadd.f32 %v2274, %v2295
      %v2325 = vadd.f32 %v2275, %v2297
      %v2326 = vadd.f32 %v2276, %v2299
      %v2327 = vadd.f32 %v2277, %v2301
      %v2328 = vadd.f32 %v2278, %v2303
      %v2329 = vadd.f32 %v2279, %v2305
      %v2330 = vadd.f32 %v2280, %v2307
      %v2331 = vadd.f32 %v2281, %v2309
      %v2332 = vadd.f32 %v2282, %v2311
      %v2333 = vadd.f32 %v2283, %v2313
      %v2334 = vxor.u32 %v2324, 2147483648
      %v2335 = vxor.u32 %v2325, 2147483648
      %v2336 = vxor.u32 %v2326, 2147483648
      %v2337 = vxor.u32 %v2327, 2147483648
      %v2338 = vxor.u32 %v2328, 2147483648
      %v2339 = vxor.u32 %v2329, 2147483648
      %v2340 = vxor.u32 %v2330, 2147483648
      %v2341 = vxor.u32 %v2331, 2147483648
      %v2342 = vxor.u32 %v2332, 2147483648
      %v2343 = vxor.u32 %v2333, 2147483648
      %v2344 = vmul.f32 %v2334, 1.442695
      %v2345 = vpow.pop %v2344
      %v2346 = vmul.f32 %v2335, 1.442695
      %v2347 = vpow.pop %v2346
      %v2348 = vmul.f32 %v2336, 1.442695
      %v2349 = vpow.pop %v2348
      %v2350 = vmul.f32 %v2337, 1.442695
      %v2351 = vpow.pop %v2350
      %v2352 = vmul.f32 %v2338, 1.442695
      %v2353 = vpow.pop %v2352
      %v2354 = vmul.f32 %v2339, 1.442695
      %v2355 = vpow.pop %v2354
      %v2356 = vmul.f32 %v2340, 1.442695
      %v2357 = vpow.pop %v2356
      %v2358 = vmul.f32 %v2341, 1.442695
      %v2359 = vpow.pop %v2358
      %v2360 = vmul.f32 %v2342, 1.442695
      %v2361 = vpow.pop %v2360
      %v2362 = vmul.f32 %v2343, 1.442695
      %v2363 = vpow.pop %v2362
      %v2364 = vadd.f32 %v2345, 1.0
      %v2365 = vadd.f32 %v2347, 1.0
      %v2366 = vadd.f32 %v2349, 1.0
      %v2367 = vadd.f32 %v2351, 1.0
      %v2368 = vadd.f32 %v2353, 1.0
      %v2369 = vadd.f32 %v2355, 1.0
      %v2370 = vadd.f32 %v2357, 1.0
      %v2371 = vadd.f32 %v2359, 1.0
      %v2372 = vadd.f32 %v2361, 1.0
      %v2373 = vadd.f32 %v2363, 1.0
      %v2374 = vrcp.pop %v2364
      %v2375 = vmul.f32 1.0, %v2374
      %v2376 = vrcp.pop %v2365
      %v2377 = vmul.f32 1.0, %v2376
      %v2378 = vrcp.pop %v2366
      %v2379 = vmul.f32 1.0, %v2378
      %v2380 = vrcp.pop %v2367
      %v2381 = vmul.f32 1.0, %v2380
      %v2382 = vrcp.pop %v2368
      %v2383 = vmul.f32 1.0, %v2382
      %v2384 = vrcp.pop %v2369
      %v2385 = vmul.f32 1.0, %v2384
      %v2386 = vrcp.pop %v2370
      %v2387 = vmul.f32 1.0, %v2386
      %v2388 = vrcp.pop %v2371
      %v2389 = vmul.f32 1.0, %v2388
      %v2390 = vrcp.pop %v2372
      %v2391 = vmul.f32 1.0, %v2390
      %v2392 = vrcp.pop %v2373
      %v2393 = vmul.f32 1.0, %v2392
      %v2394 = vmul.f32 %v2375, %v568
      %v2395 = vmul.f32 %v2377, %v574
      %v2396 = vmul.f32 %v2379, %v580
      %v2397 = vmul.f32 %v2381, %v586
      %v2398 = vmul.f32 %v2383, %v592
      %v2399 = vmul.f32 %v2385, %v598
      %v2400 = vmul.f32 %v2387, %v604
      %v2401 = vmul.f32 %v2389, %v610
      %v2402 = vmul.f32 %v2391, %v616
      %v2403 = vmul.f32 %v2393, %v622
      %2414 = vrot.lane.b32.xlu0 %v2394, 64
      %v2415 = vpop.permute.xlu0 %2414
      %2416 = vrot.lane.b32.xlu0 %v2395, 64
      %v2417 = vpop.permute.xlu0 %2416
      %2418 = vrot.lane.b32.xlu0 %v2396, 64
      %v2419 = vpop.permute.xlu0 %2418
      %2420 = vrot.lane.b32.xlu0 %v2397, 64
      %v2421 = vpop.permute.xlu0 %2420
      %2422 = vrot.lane.b32.xlu0 %v2398, 64
      %v2423 = vpop.permute.xlu0 %2422
      %2424 = vrot.lane.b32.xlu0 %v2399, 64
      %v2425 = vpop.permute.xlu0 %2424
      %2426 = vrot.lane.b32.xlu0 %v2400, 64
      %v2427 = vpop.permute.xlu0 %2426
      %2428 = vrot.lane.b32.xlu0 %v2401, 64
      %v2429 = vpop.permute.xlu0 %2428
      %2430 = vrot.lane.b32.xlu0 %v2402, 64
      %v2431 = vpop.permute.xlu0 %2430
      %2432 = vrot.lane.b32.xlu0 %v2403, 64
      %v2433 = vpop.permute.xlu0 %2432
      %v2444 = vadd.f32 %v2274, %v2415
      %v2445 = vadd.f32 %v2275, %v2417
      %v2446 = vadd.f32 %v2276, %v2419
      %v2447 = vadd.f32 %v2277, %v2421
      %v2448 = vadd.f32 %v2278, %v2423
      %v2449 = vadd.f32 %v2279, %v2425
      %v2450 = vadd.f32 %v2280, %v2427
      %v2451 = vadd.f32 %v2281, %v2429
      %v2452 = vadd.f32 %v2282, %v2431
      %v2453 = vadd.f32 %v2283, %v2433
      %v2454 = vtanh.pop %v2444
      %v2455 = vtanh.pop %v2445
      %v2456 = vtanh.pop %v2446
      %v2457 = vtanh.pop %v2447
      %v2458 = vtanh.pop %v2448
      %v2459 = vtanh.pop %v2449
      %v2460 = vtanh.pop %v2450
      %v2461 = vtanh.pop %v2451
      %v2462 = vtanh.pop %v2452
      %v2463 = vtanh.pop %v2453
      %2474 = vrot.lane.b32.xlu0 %v2454, 64
      %v2475 = vpop.permute.xlu0 %2474
      %2476 = vrot.lane.b32.xlu0 %v2455, 64
      %v2477 = vpop.permute.xlu0 %2476
      %2478 = vrot.lane.b32.xlu0 %v2456, 64
      %v2479 = vpop.permute.xlu0 %2478
      %2480 = vrot.lane.b32.xlu0 %v2457, 64
      %v2481 = vpop.permute.xlu0 %2480
      %2482 = vrot.lane.b32.xlu0 %v2458, 64
      %v2483 = vpop.permute.xlu0 %2482
      %2484 = vrot.lane.b32.xlu0 %v2459, 64
      %v2485 = vpop.permute.xlu0 %2484
      %2486 = vrot.lane.b32.xlu0 %v2460, 64
      %v2487 = vpop.permute.xlu0 %2486
      %2488 = vrot.lane.b32.xlu0 %v2461, 64
      %v2489 = vpop.permute.xlu0 %2488
      %2490 = vrot.lane.b32.xlu0 %v2462, 64
      %v2491 = vpop.permute.xlu0 %2490
      %2492 = vrot.lane.b32.xlu0 %v2463, 64
      %v2493 = vpop.permute.xlu0 %2492
      %v2504 = vsub.f32 %v447, %v2475
      %v2505 = vsub.f32 %v448, %v2477
      %v2506 = vsub.f32 %v449, %v2479
      %v2507 = vsub.f32 %v450, %v2481
      %v2508 = vsub.f32 %v451, %v2483
      %v2509 = vsub.f32 %v452, %v2485
      %v2510 = vsub.f32 %v453, %v2487
      %v2511 = vsub.f32 %v454, %v2489
      %v2512 = vsub.f32 %v455, %v2491
      %v2513 = vsub.f32 %v456, %v2493
      %2524 = vrot.lane.b32.xlu0 %v2504, 32
      %v2525 = vpop.permute.xlu0 %2524
      %2526 = vrot.lane.b32.xlu0 %v2505, 32
      %v2527 = vpop.permute.xlu0 %2526
      %2528 = vrot.lane.b32.xlu0 %v2506, 32
      %v2529 = vpop.permute.xlu0 %2528
      %2530 = vrot.lane.b32.xlu0 %v2507, 32
      %v2531 = vpop.permute.xlu0 %2530
      %2532 = vrot.lane.b32.xlu0 %v2508, 32
      %v2533 = vpop.permute.xlu0 %2532
      %2534 = vrot.lane.b32.xlu0 %v2509, 32
      %v2535 = vpop.permute.xlu0 %2534
      %2536 = vrot.lane.b32.xlu0 %v2510, 32
      %v2537 = vpop.permute.xlu0 %2536
      %2538 = vrot.lane.b32.xlu0 %v2511, 32
      %v2539 = vpop.permute.xlu0 %2538
      %2540 = vrot.lane.b32.xlu0 %v2512, 32
      %v2541 = vpop.permute.xlu0 %2540
      %2542 = vrot.lane.b32.xlu0 %v2513, 32
      %v2543 = vpop.permute.xlu0 %2542
      %v2554 = vmul.f32 %v2375, %v2525
      %v2555 = vmul.f32 %v2377, %v2527
      %v2556 = vmul.f32 %v2379, %v2529
      %v2557 = vmul.f32 %v2381, %v2531
      %v2558 = vmul.f32 %v2383, %v2533
      %v2559 = vmul.f32 %v2385, %v2535
      %v2560 = vmul.f32 %v2387, %v2537
      %v2561 = vmul.f32 %v2389, %v2539
      %v2562 = vmul.f32 %v2391, %v2541
      %v2563 = vmul.f32 %v2393, %v2543
      %2574 = vrot.lane.b32.xlu0 %v2554, 32
      %v2575 = vpop.permute.xlu0 %2574
      %2576 = vrot.lane.b32.xlu0 %v2555, 32
      %v2577 = vpop.permute.xlu0 %2576
      %2578 = vrot.lane.b32.xlu0 %v2556, 32
      %v2579 = vpop.permute.xlu0 %2578
      %2580 = vrot.lane.b32.xlu0 %v2557, 32
      %v2581 = vpop.permute.xlu0 %2580
      %2582 = vrot.lane.b32.xlu0 %v2558, 32
      %v2583 = vpop.permute.xlu0 %2582
      %2584 = vrot.lane.b32.xlu0 %v2559, 32
      %v2585 = vpop.permute.xlu0 %2584
      %2586 = vrot.lane.b32.xlu0 %v2560, 32
      %v2587 = vpop.permute.xlu0 %2586
      %2588 = vrot.lane.b32.xlu0 %v2561, 32
      %v2589 = vpop.permute.xlu0 %2588
      %2590 = vrot.lane.b32.xlu0 %v2562, 32
      %v2591 = vpop.permute.xlu0 %2590
      %2592 = vrot.lane.b32.xlu0 %v2563, 32
      %v2593 = vpop.permute.xlu0 %2592
      %v2604 = vadd.f32 %v2454, %v2575
      %v2605 = vadd.f32 %v2455, %v2577
      %v2606 = vadd.f32 %v2456, %v2579
      %v2607 = vadd.f32 %v2457, %v2581
      %v2608 = vadd.f32 %v2458, %v2583
      %v2609 = vadd.f32 %v2459, %v2585
      %v2610 = vadd.f32 %v2460, %v2587
      %v2611 = vadd.f32 %v2461, %v2589
      %v2612 = vadd.f32 %v2462, %v2591
      %v2613 = vadd.f32 %v2463, %v2593
      %2624 = vrot.lane.b32.xlu0 %v2604, 64
      %v2625 = vpop.permute.xlu0 %2624
      %2626 = vrot.lane.b32.xlu0 %v2605, 64
      %v2627 = vpop.permute.xlu0 %2626
      %2628 = vrot.lane.b32.xlu0 %v2606, 64
      %v2629 = vpop.permute.xlu0 %2628
      %2630 = vrot.lane.b32.xlu0 %v2607, 64
      %v2631 = vpop.permute.xlu0 %2630
      %2632 = vrot.lane.b32.xlu0 %v2608, 64
      %v2633 = vpop.permute.xlu0 %2632
      %2634 = vrot.lane.b32.xlu0 %v2609, 64
      %v2635 = vpop.permute.xlu0 %2634
      %2636 = vrot.lane.b32.xlu0 %v2610, 64
      %v2637 = vpop.permute.xlu0 %2636
      %2638 = vrot.lane.b32.xlu0 %v2611, 64
      %v2639 = vpop.permute.xlu0 %2638
      %2640 = vrot.lane.b32.xlu0 %v2612, 64
      %v2641 = vpop.permute.xlu0 %2640
      %2642 = vrot.lane.b32.xlu0 %v2613, 64
      %v2643 = vpop.permute.xlu0 %2642
      %2654 = vst.msk [vmem:[%s405] sm:$0xff] %vm468, %v2625
      %2655 = vst.msk [vmem:[%s405 + $0x8] sm:$0xff] %vm468, %v2627
      %2656 = vst.msk [vmem:[%s405 + $0x10] sm:$0xff] %vm468, %v2629
      %2657 = vst.msk [vmem:[%s405 + $0x18] sm:$0xff] %vm468, %v2631
      %2658 = vst.msk [vmem:[%s405 + $0x20] sm:$0xff] %vm468, %v2633
      %2659 = vst.msk [vmem:[%s405 + $0x28] sm:$0xff] %vm468, %v2635
      %2660 = vst.msk [vmem:[%s405 + $0x30] sm:$0xff] %vm468, %v2637
      %2661 = vst.msk [vmem:[%s405 + $0x38] sm:$0xff] %vm468, %v2639
      %2662 = vst.msk [vmem:[%s405 + $0x40] sm:$0xff] %vm468, %v2641
      %2663 = vst.msk [vmem:[%s405 + $0x48] sm:$0xff] %vm468, %v2643
      %s2664 = smul.u32 10, %s21
      %p2665 = scmp.lt.s32.totalorder %s2664, 19
      %s2666 = scalar_select %p2665, %s2664, 19
      %s2667 = smul.addr %s2666, 8
      %s2668 = scalar_lea.vmem %s10, %s2667
      // Predicated region
      $region61: #{tpu_custom_call.1} parent=59 // pred_check
        %p2669 = pneg %p264
      $region62: #{tpu_custom_call.1} parent=59 // pred_check_branch
        %2671 = sbr.rel (%p2669) target = $region64
      $region63: #{tpu_custom_call.1} parent=59 // pred_region
        %s2672 = smul.u32 10, %s21
      $region64: #{tpu_custom_call.1} parent=59 // pred_fallthru
        _
    $region60: #{tpu_custom_call.1} parent=5 // pred_fallthru
      _
    %p2673 = scmp.le.s32.totalorder 2, %s16
    // Predicated region
    $region65: #{tpu_custom_call.1} parent=5 // pred_check
      %p2674 = pneg %p2673
    $region66: #{tpu_custom_call.1} parent=5 // pred_check_branch
      %2676 = sbr.rel (%p2674) target = $region68
    $region67: #{tpu_custom_call.1} parent=5 // pred_region
      %s2677 = ssub.s32 %s16, 2
      // Predicated region
      $region69: #{tpu_custom_call.1} parent=67 // pred_check
        %p2678 = pneg %p270
      $region70: #{tpu_custom_call.1} parent=67 // pred_check_branch
        %2680 = sbr.rel (%p2678) target = $region72
      $region71: #{tpu_custom_call.1} parent=67 // pred_region
        %s2681 = smul.u32 10, %s22
        %p2682 = scmp.lt.s32.totalorder %s2681, 19
        %s2683 = scalar_select %p2682, %s2681, 19
        %s2684 = smul.addr %s2683, 8
        %s2685 = scalar_lea.vmem %s10, %s2684
      $region72: #{tpu_custom_call.1} parent=67 // pred_fallthru
        _
    $region68: #{tpu_custom_call.1} parent=5 // pred_fallthru
      _
  $region6: #{tpu_custom_call.1} parent=0 // loop_footer
    %s20 = sadd.s32 1, %s16
  $region7: #{tpu_custom_call.1} parent=0 // loop_footer_branch
    %15 = sbr.rel target = $region3
  $region8: #{tpu_custom_call.1} parent=0 // loop_exit
    _

</llo_original>
